<compile_context>
chip_gen: v7x
topology: tpu7x:2x2x1
jax: 0.10.0
libtpu: 0.0.40
codegen_flags: <defaults>
</compile_context>

<pallas_src>
import jax
import jax.numpy as jnp
from jax.experimental import pallas as pl
from jax.experimental.pallas import tpu as pltpu


def attention_kernel(q_ref, f_ref, m_ref,
                     w1_ref, wq_ref, b1_ref, w2_ref, b2_ref, w3_ref, b3_ref,
                     o_ref):
    # Block shapes: q (D, BB), f (T, D, BB), m (T, BB); BB is the lane axis.
    T, D, BB = f_ref.shape
    f32 = jnp.float32

    q = q_ref[...]                                    # (D, BB)
    f = f_ref[...]                                    # (T, D, BB)
    m = m_ref[...]                                    # (T, BB)

    # Layer 1: sigmoid(concat([f, q, f*q, q-f]) @ W1 + b1), with the concat folded as
    #   [f ; f*q] @ Wf  +  q @ Wq  +  b1        (host-side algebra, see wrapper).
    fq = f * q[None, :, :]                            # (T, D, BB)  broadcast over T
    x = jnp.concatenate([f, fq], axis=1)              # (T, 2D, BB)  K = 2D = 16
    w1b = jnp.broadcast_to(w1_ref[...][None], (T,) + w1_ref.shape)   # (T, H1, 2D)
    pre1 = jnp.einsum("thk,tkb->thb", w1b, x,
                      preferred_element_type=f32)     # (T, H1, BB)  single MXU pass
    # Row-constant query term (+ bias): computed once per block, reused for all T.
    q_term = jnp.dot(wq_ref[...], q, preferred_element_type=f32) + b1_ref[...]  # (H1, BB)
    h1 = jax.nn.sigmoid(pre1 + q_term[None, :, :])    # (T, H1, BB)

    # Layer 2.
    w2b = jnp.broadcast_to(w2_ref[...][None], (T,) + w2_ref.shape)   # (T, H2, H1)
    h2 = jax.nn.sigmoid(
        jnp.einsum("tgh,thb->tgb", w2b, h1, preferred_element_type=f32)
        + b2_ref[...][None, :, :])                    # (T, H2, BB)

    # Score head (H2 -> 1): VPU multiply + sublane reduction instead of an N=1 matmul.
    s = jnp.sum(h2 * w3_ref[...][None, :, :], axis=1) + b3_ref[0]    # (T, BB)

    # Masked softmax over T (sublane axis), then re-mask, as in the reference.
    neg = jnp.float32(-2.0 ** 31)
    s = jnp.where(m == 1.0, s, neg)
    s_max = jnp.max(s, axis=0, keepdims=True)         # (1, BB)
    e = jnp.exp(s - s_max)
    denom = jnp.sum(e, axis=0, keepdims=True)         # (1, BB)
    # Single reciprocal per column on the EUP (exact, keeps the 1e-4 tolerance).
    p = e * pl.reciprocal(denom, approx=False) * m    # (T, BB)

    # out^T[d, b] = sum_t p[t, b] * fact[b, t, d]  -> dense (D, BB) store.
    o_ref[...] = jnp.sum(p[:, None, :] * f, axis=0)   # (D, BB)


def _round_up(x, m):
    return ((x + m - 1) // m) * m


def attention_layer(query, fact, mask, params, *, block_b=512):
    """Pallas implementation of AttentionLayer.forward (return_scores=False)."""
    # TODO(synk): return_scores=True path (returning the (B, T) scores) is not implemented.
    w1, b1, w2, b2, w3, b3 = params
    B, T, D = fact.shape
    H1 = w1.shape[1]
    H2 = w2.shape[1]
    f32 = jnp.float32

    # ---- fold the 4-way concat weight once on the host ----
    # comb @ W1 = f@(W1a-W1d) + (f*q)@W1c + q@(W1b+W1d)
    w1 = w1.astype(f32)
    w1a, w1b_, w1c, w1d = w1[0:D], w1[D:2 * D], w1[2 * D:3 * D], w1[3 * D:4 * D]
    wf_t = jnp.concatenate([w1a - w1d, w1c], axis=0).T       # (H1, 2D)  multiplies [f ; f*q]
    wq_t = (w1b_ + w1d).T                                    # (H1, D)   multiplies query
    b1_c = b1.astype(f32).reshape(H1, 1)
    w2_t = w2.astype(f32).T                                  # (H2, H1)
    b2_c = b2.astype(f32).reshape(H2, 1)
    w3_c = w3.astype(f32).reshape(H2, 1)
    b3_s = b3.astype(f32).reshape(1)                         # scalar, lives in SMEM

    # ---- tokens-on-lanes layout: batch goes on the 128-lane axis ----
    BB = min(_round_up(block_b, 128), _round_up(B, 128))     # lane-dense batch block
    Bp = _round_up(B, BB)
    pad = Bp - B

    q_t = query.astype(f32).T                                # (D, B)
    f_t = fact.astype(f32).transpose(1, 2, 0)                # (T, D, B)
    m_t = mask.astype(f32).T                                 # (T, B)
    if pad:
        q_t = jnp.pad(q_t, ((0, 0), (0, pad)))
        f_t = jnp.pad(f_t, ((0, 0), (0, 0), (0, pad)))
        m_t = jnp.pad(m_t, ((0, 0), (0, pad)))               # padded cols fully masked -> 0

    out_t = pl.pallas_call(
        attention_kernel,
        out_shape=jax.ShapeDtypeStruct((D, Bp), f32),
        grid_spec=pltpu.PrefetchScalarGridSpec(
            num_scalar_prefetch=0,
            grid=(Bp // BB,),
            in_specs=[
                pl.BlockSpec((D, BB), lambda b: (0, b)),          # query^T
                pl.BlockSpec((T, D, BB), lambda b: (0, 0, b)),    # fact^T
                pl.BlockSpec((T, BB), lambda b: (0, b)),          # mask^T
                pl.BlockSpec((H1, 2 * D), lambda b: (0, 0)),      # [W1a-W1d ; W1c]^T
                pl.BlockSpec((H1, D), lambda b: (0, 0)),          # (W1b+W1d)^T
                pl.BlockSpec((H1, 1), lambda b: (0, 0)),          # b1
                pl.BlockSpec((H2, H1), lambda b: (0, 0)),         # W2^T
                pl.BlockSpec((H2, 1), lambda b: (0, 0)),          # b2
                pl.BlockSpec((H2, 1), lambda b: (0, 0)),          # W3 column
                pl.BlockSpec(memory_space=pltpu.MemorySpace.SMEM),  # b3 scalar
            ],
            out_specs=pl.BlockSpec((D, BB), lambda b: (0, b)),
        ),
        compiler_params=pltpu.CompilerParams(
            dimension_semantics=("parallel",)),  # batch blocks shard across v7x's 2 TCs
    )(q_t, f_t, m_t, wf_t, wq_t, b1_c, w2_t, b2_c, w3_c, b3_s)

    return out_t.T[:B]                                        # back to (B, D)


def attention_ref(query, fact, mask, params):
    """Pure-JAX reference matching the PyTorch forward."""
    w1, b1, w2, b2, w3, b3 = params
    B, T, D = fact.shape
    q = jnp.broadcast_to(query.reshape(B, 1, D), (B, T, D))
    comb = jnp.concatenate([fact, q, fact * q, q - fact], axis=2)
    h = jax.nn.sigmoid(comb @ w1 + b1)
    h = jax.nn.sigmoid(h @ w2 + b2)
    s = (h @ w3 + b3)[..., 0]                       # (B, T)
    s = jnp.where(mask == 1, s, jnp.float32(-2.0 ** 31))
    p = jax.nn.softmax(s, axis=-1) * mask
    return jnp.einsum("bt,btd->bd", p, fact)


if __name__ == "__main__":
    # Module config: embedding_dim=4 -> fact dim D = 2*embedding_dim = 8 so that the
    # concatenated feature (4*D = 32) matches embedding_dim*8 (the first Linear's input).
    embedding_dim = 4
    hidden_size = [16, 8]
    # B=200 pads to Bp=256; with block_b=128 the grid is (2,): even, so both of a
    # v7x chip's TensorCores get a block, and lanes are fully dense (BB=128).
    B, T, D = 200, 8, 2 * embedding_dim

    key = jax.random.PRNGKey(0)
    kq, kf, km, k1, k2, k3, kb1, kb2, kb3 = jax.random.split(key, 9)

    query = jax.random.normal(kq, (B, D), dtype=jnp.float32)
    fact = jax.random.normal(kf, (B, T, D), dtype=jnp.float32)
    mask = (jax.random.uniform(km, (B, T)) < 0.7).astype(jnp.float32)
    mask = mask.at[:, 0].set(1.0)             # every row keeps at least one valid slot

    # Deterministic parameter init (shapes from the module __init__).
    w1 = 0.1 * jax.random.normal(k1, (embedding_dim * 8, hidden_size[0]), dtype=jnp.float32)
    b1 = 0.05 * jax.random.normal(kb1, (1, hidden_size[0]), dtype=jnp.float32)
    w2 = 0.1 * jax.random.normal(k2, (hidden_size[0], hidden_size[1]), dtype=jnp.float32)
    b2 = 0.05 * jax.random.normal(kb2, (1, hidden_size[1]), dtype=jnp.float32)
    w3 = 0.1 * jax.random.normal(k3, (hidden_size[1], 1), dtype=jnp.float32)
    b3 = 0.05 * jax.random.normal(kb3, (1, 1), dtype=jnp.float32)
    params = (w1, b1, w2, b2, w3, b3)

    out = attention_layer(query, fact, mask, params, block_b=128)
    out = jax.block_until_ready(out)

    ref = attention_ref(query, fact, mask, params)
    assert out.shape == (B, D), out.shape
    assert jnp.allclose(out, ref, atol=1e-4, rtol=1e-4), (out, ref)

    print("KERNEL_OK")
</pallas_src>

<mosaic_0001>
module attributes {stable_mosaic.version = 11 : i64} {
  func.func @attention_kernel(%arg0: i32, %arg1: memref<8x128xf32, #tpu.memory_space<vmem>>, %arg2: memref<8x8x128xf32, #tpu.memory_space<vmem>>, %arg3: memref<8x128xf32, #tpu.memory_space<vmem>>, %arg4: memref<16x16xf32, #tpu.memory_space<vmem>>, %arg5: memref<16x8xf32, #tpu.memory_space<vmem>>, %arg6: memref<16x1xf32, #tpu.memory_space<vmem>>, %arg7: memref<8x16xf32, #tpu.memory_space<vmem>>, %arg8: memref<8x1xf32, #tpu.memory_space<vmem>>, %arg9: memref<8x1xf32, #tpu.memory_space<vmem>>, %arg10: memref<1xf32, #tpu.memory_space<smem>>, %arg11: memref<8x128xf32, #tpu.memory_space<vmem>>) attributes {dimension_semantics = [#tpu.dimension_semantics<parallel>], iteration_bounds = array<i64: 2>, scalar_prefetch = 0 : i64, scratch_operands = 0 : i64, tpu.core_type = #tpu.core_type<tc>, window_params = [{transform_indices = @transform_0, window_bounds = array<i64: 8, 128>}, {transform_indices = @transform_1, window_bounds = array<i64: 8, 8, 128>}, {transform_indices = @transform_2, window_bounds = array<i64: 8, 128>}, {pipeline_mode = #tpu.pipeline_mode<synchronous>, transform_indices = @transform_3, window_bounds = array<i64: 16, 16>}, {pipeline_mode = #tpu.pipeline_mode<synchronous>, transform_indices = @transform_4, window_bounds = array<i64: 16, 8>}, {pipeline_mode = #tpu.pipeline_mode<synchronous>, transform_indices = @transform_5, window_bounds = array<i64: 16, 1>}, {pipeline_mode = #tpu.pipeline_mode<synchronous>, transform_indices = @transform_6, window_bounds = array<i64: 8, 16>}, {pipeline_mode = #tpu.pipeline_mode<synchronous>, transform_indices = @transform_7, window_bounds = array<i64: 8, 1>}, {pipeline_mode = #tpu.pipeline_mode<synchronous>, transform_indices = @transform_8, window_bounds = array<i64: 8, 1>}, {transform_indices = @transform_9, window_bounds = array<i64: 1>}, {transform_indices = @transform_10, window_bounds = array<i64: 8, 128>}]} {
    %c0 = arith.constant 0 : index
    %c0_0 = arith.constant 0 : index
    %0 = vector.load %arg1[%c0, %c0_0] : memref<8x128xf32, #tpu.memory_space<vmem>>, vector<8x128xf32>
    %c0_1 = arith.constant 0 : index
    %c0_2 = arith.constant 0 : index
    %c0_3 = arith.constant 0 : index
    %1 = vector.load %arg2[%c0_1, %c0_2, %c0_3] : memref<8x8x128xf32, #tpu.memory_space<vmem>>, vector<8x8x128xf32>
    %c0_4 = arith.constant 0 : index
    %c0_5 = arith.constant 0 : index
    %2 = vector.load %arg3[%c0_4, %c0_5] : memref<8x128xf32, #tpu.memory_space<vmem>>, vector<8x128xf32>
    %3 = vector.shape_cast %0 : vector<8x128xf32> to vector<1x8x128xf32>
    %4 = vector.broadcast %3 : vector<1x8x128xf32> to vector<8x8x128xf32>
    %5 = arith.mulf %1, %4 : vector<8x8x128xf32>
    %6 = tpu.concatenate %1, %5 in 1 : vector<8x8x128xf32>, vector<8x8x128xf32> -> vector<8x16x128xf32>
    %c0_6 = arith.constant 0 : index
    %c0_7 = arith.constant 0 : index
    %7 = vector.load %arg4[%c0_6, %c0_7] : memref<16x16xf32, #tpu.memory_space<vmem>>, vector<16x16xf32>
    %8 = vector.shape_cast %7 : vector<16x16xf32> to vector<1x16x16xf32>
    %9 = vector.shape_cast %8 : vector<1x16x16xf32> to vector<1x16x16xf32>
    %10 = vector.broadcast %9 : vector<1x16x16xf32> to vector<8x16x16xf32>
    "tpu.trace_start"() <{level = 10 : i32, message = "thk,tkb->thb"}> : () -> ()
    %cst = arith.constant dense<0.000000e+00> : vector<8x16x128xf32>
    %11 = tpu.matmul %10, %6, %cst {dimension_numbers = #tpu.dot_dimension_numbers<[2], [1], [1], [2], [0, 0, 0, 1, 1, 2], [0], [0]>} : vector<8x16x16xf32>, vector<8x16x128xf32>, vector<8x16x128xf32> -> vector<8x16x128xf32>
    "tpu.trace_stop"() : () -> ()
    %c0_8 = arith.constant 0 : index
    %c0_9 = arith.constant 0 : index
    %12 = vector.load %arg5[%c0_8, %c0_9] : memref<16x8xf32, #tpu.memory_space<vmem>>, vector<16x8xf32>
    %cst_10 = arith.constant dense<0.000000e+00> : vector<16x128xf32>
    %13 = tpu.matmul %12, %0, %cst_10 {dimension_numbers = #tpu.dot_dimension_numbers<[1], [0], [0], [1], [0, 0, 1, 1], [], []>} : vector<16x8xf32>, vector<8x128xf32>, vector<16x128xf32> -> vector<16x128xf32>
    %c0_11 = arith.constant 0 : index
    %c0_12 = arith.constant 0 : index
    %14 = vector.load %arg6[%c0_11, %c0_12] : memref<16x1xf32, #tpu.memory_space<vmem>>, vector<16x1xf32>
    %15 = vector.broadcast %14 : vector<16x1xf32> to vector<16x128xf32>
    %16 = arith.addf %13, %15 : vector<16x128xf32>
    %17 = vector.shape_cast %16 : vector<16x128xf32> to vector<1x16x128xf32>
    %18 = vector.broadcast %17 : vector<1x16x128xf32> to vector<8x16x128xf32>
    %19 = arith.addf %11, %18 : vector<8x16x128xf32>
    %20 = arith.negf %19 : vector<8x16x128xf32>
    %21 = math.exp %20 : vector<8x16x128xf32>
    %cst_13 = arith.constant 1.000000e+00 : f32
    %22 = vector.broadcast %cst_13 : f32 to vector<8x16x128xf32>
    %23 = arith.addf %22, %21 : vector<8x16x128xf32>
    %24 = arith.divf %22, %23 : vector<8x16x128xf32>
    %c0_14 = arith.constant 0 : index
    %c0_15 = arith.constant 0 : index
    %25 = vector.load %arg7[%c0_14, %c0_15] : memref<8x16xf32, #tpu.memory_space<vmem>>, vector<8x16xf32>
    %26 = vector.shape_cast %25 : vector<8x16xf32> to vector<1x8x16xf32>
    %27 = vector.shape_cast %26 : vector<1x8x16xf32> to vector<1x8x16xf32>
    %28 = vector.broadcast %27 : vector<1x8x16xf32> to vector<8x8x16xf32>
    "tpu.trace_start"() <{level = 10 : i32, message = "tgh,thb->tgb"}> : () -> ()
    %cst_16 = arith.constant dense<0.000000e+00> : vector<8x8x128xf32>
    %29 = tpu.matmul %28, %24, %cst_16 {dimension_numbers = #tpu.dot_dimension_numbers<[2], [1], [1], [2], [0, 0, 0, 1, 1, 2], [0], [0]>} : vector<8x8x16xf32>, vector<8x16x128xf32>, vector<8x8x128xf32> -> vector<8x8x128xf32>
    "tpu.trace_stop"() : () -> ()
    %c0_17 = arith.constant 0 : index
    %c0_18 = arith.constant 0 : index
    %30 = vector.load %arg8[%c0_17, %c0_18] : memref<8x1xf32, #tpu.memory_space<vmem>>, vector<8x1xf32>
    %31 = vector.shape_cast %30 : vector<8x1xf32> to vector<1x8x1xf32>
    %32 = vector.broadcast %31 : vector<1x8x1xf32> to vector<8x8x128xf32>
    %33 = arith.addf %29, %32 : vector<8x8x128xf32>
    %34 = arith.negf %33 : vector<8x8x128xf32>
    %35 = math.exp %34 : vector<8x8x128xf32>
    %cst_19 = arith.constant 1.000000e+00 : f32
    %36 = vector.broadcast %cst_19 : f32 to vector<8x8x128xf32>
    %37 = arith.addf %36, %35 : vector<8x8x128xf32>
    %38 = arith.divf %36, %37 : vector<8x8x128xf32>
    %c0_20 = arith.constant 0 : index
    %c0_21 = arith.constant 0 : index
    %39 = vector.load %arg9[%c0_20, %c0_21] : memref<8x1xf32, #tpu.memory_space<vmem>>, vector<8x1xf32>
    %40 = vector.shape_cast %39 : vector<8x1xf32> to vector<1x8x1xf32>
    %41 = vector.broadcast %40 : vector<1x8x1xf32> to vector<8x8x128xf32>
    %42 = arith.mulf %38, %41 : vector<8x8x128xf32>
    %cst_22 = arith.constant dense<0.000000e+00> : vector<8x128xf32>
    %43 = vector.multi_reduction <add>, %42, %cst_22 [1] : vector<8x8x128xf32> to vector<8x128xf32>
    %c0_23 = arith.constant 0 : index
    %44 = memref.load %arg10[%c0_23] : memref<1xf32, #tpu.memory_space<smem>>
    %45 = vector.broadcast %44 : f32 to vector<8x128xf32>
    %46 = arith.addf %43, %45 : vector<8x128xf32>
    %cst_24 = arith.constant 1.000000e+00 : f32
    %47 = vector.broadcast %cst_24 : f32 to vector<8x128xf32>
    %48 = arith.cmpf oeq, %2, %47 : vector<8x128xf32>
    %cst_25 = arith.constant -2.14748365E+9 : f32
    %49 = vector.broadcast %cst_25 : f32 to vector<8x128xf32>
    %50 = arith.select %48, %46, %49 : vector<8x128xi1>, vector<8x128xf32>
    %cst_26 = arith.constant dense<0xFF800000> : vector<128xf32>
    %51 = vector.multi_reduction <maximumf>, %50, %cst_26 [0] : vector<8x128xf32> to vector<128xf32>
    %52 = vector.shape_cast %51 : vector<128xf32> to vector<1x128xf32>
    %53 = vector.broadcast %52 : vector<1x128xf32> to vector<8x128xf32>
    %54 = arith.subf %50, %53 : vector<8x128xf32>
    %55 = math.exp %54 : vector<8x128xf32>
    %cst_27 = arith.constant dense<0.000000e+00> : vector<128xf32>
    %56 = vector.multi_reduction <add>, %55, %cst_27 [0] : vector<8x128xf32> to vector<128xf32>
    %57 = vector.shape_cast %56 : vector<128xf32> to vector<1x128xf32>
    %58 = tpu.reciprocal %57 : vector<1x128xf32> -> vector<1x128xf32>
    %59 = vector.broadcast %58 : vector<1x128xf32> to vector<8x128xf32>
    %60 = arith.mulf %55, %59 : vector<8x128xf32>
    %61 = arith.mulf %60, %2 : vector<8x128xf32>
    %62 = vector.shape_cast %61 : vector<8x128xf32> to vector<8x1x128xf32>
    %63 = vector.broadcast %62 : vector<8x1x128xf32> to vector<8x8x128xf32>
    %64 = arith.mulf %63, %1 : vector<8x8x128xf32>
    %cst_28 = arith.constant dense<0.000000e+00> : vector<8x128xf32>
    %65 = vector.multi_reduction <add>, %64, %cst_28 [0] : vector<8x8x128xf32> to vector<8x128xf32>
    %c0_29 = arith.constant 0 : index
    %c0_30 = arith.constant 0 : index
    %66 = vector.load %arg11[%c0_29, %c0_30] : memref<8x128xf32, #tpu.memory_space<vmem>>, vector<8x128xf32>
    tpu.vector_store %arg11[%c0_29, %c0_30], %65 {strides = array<i32>} : memref<8x128xf32, #tpu.memory_space<vmem>>, vector<8x128xf32>,
    return
  }
  func.func @transform_0(%arg0: i32) -> (i32, i32) {
    %c0_i32 = arith.constant 0 : i32
    %c0_i32_0 = arith.constant 0 : i32
    return %c0_i32, %arg0 : i32, i32
  }
  func.func @transform_1(%arg0: i32) -> (i32, i32, i32) {
    %c0_i32 = arith.constant 0 : i32
    %c0_i32_0 = arith.constant 0 : i32
    %c0_i32_1 = arith.constant 0 : i32
    return %c0_i32, %c0_i32_0, %arg0 : i32, i32, i32
  }
  func.func @transform_2(%arg0: i32) -> (i32, i32) {
    %c0_i32 = arith.constant 0 : i32
    %c0_i32_0 = arith.constant 0 : i32
    return %c0_i32, %arg0 : i32, i32
  }
  func.func @transform_3(%arg0: i32) -> (i32, i32) {
    %c0_i32 = arith.constant 0 : i32
    %c0_i32_0 = arith.constant 0 : i32
    %c0_i32_1 = arith.constant 0 : i32
    return %c0_i32, %c0_i32_0 : i32, i32
  }
  func.func @transform_4(%arg0: i32) -> (i32, i32) {
    %c0_i32 = arith.constant 0 : i32
    %c0_i32_0 = arith.constant 0 : i32
    %c0_i32_1 = arith.constant 0 : i32
    return %c0_i32, %c0_i32_0 : i32, i32
  }
  func.func @transform_5(%arg0: i32) -> (i32, i32) {
    %c0_i32 = arith.constant 0 : i32
    %c0_i32_0 = arith.constant 0 : i32
    %c0_i32_1 = arith.constant 0 : i32
    return %c0_i32, %c0_i32_0 : i32, i32
  }
  func.func @transform_6(%arg0: i32) -> (i32, i32) {
    %c0_i32 = arith.constant 0 : i32
    %c0_i32_0 = arith.constant 0 : i32
    %c0_i32_1 = arith.constant 0 : i32
    return %c0_i32, %c0_i32_0 : i32, i32
  }
  func.func @transform_7(%arg0: i32) -> (i32, i32) {
    %c0_i32 = arith.constant 0 : i32
    %c0_i32_0 = arith.constant 0 : i32
    %c0_i32_1 = arith.constant 0 : i32
    return %c0_i32, %c0_i32_0 : i32, i32
  }
  func.func @transform_8(%arg0: i32) -> (i32, i32) {
    %c0_i32 = arith.constant 0 : i32
    %c0_i32_0 = arith.constant 0 : i32
    %c0_i32_1 = arith.constant 0 : i32
    return %c0_i32, %c0_i32_0 : i32, i32
  }
  func.func @transform_9(%arg0: i32) -> i32 {
    %c0_i32 = arith.constant 0 : i32
    %c0_i32_0 = arith.constant 0 : i32
    return %c0_i32 : i32
  }
  func.func @transform_10(%arg0: i32) -> (i32, i32) {
    %c0_i32 = arith.constant 0 : i32
    %c0_i32_0 = arith.constant 0 : i32
    return %c0_i32, %arg0 : i32, i32
  }
}

</mosaic_0001>

<llo_original>
// kernel: tpu_custom_call.1
$region0: #{tpu_custom_call.1}
  #allocation0 [shape = 'u32[]', space=smem, size = 0x4, offset = 0x4, fixed_abs, tag = 'smem constant byte address 0x4 - core index']
  #allocation1 [shape = 'u32[144,128]{1,0:T(1,128)}', space=vmem, size = 0x12000, scoped, tag = 'internal scratch']
  #allocation2 [shape = 'f32[1]{0:T(128)S(6)}', space=smem, size = 0x200, scoped, tag = 'scoped memory for tpu_custom_call.1']
  %s0 = inlined_call_operand.vmem [shape: f32[8,256], index: 0, kind: input, shape index: {}]
  %s1 = inlined_call_operand.hbm [shape: f32[8,8,256], index: 1, kind: input, shape index: {}]
  %s2 = inlined_call_operand.vmem [shape: f32[8,256], index: 2, kind: input, shape index: {}]
  %s3 = inlined_call_operand.vmem [shape: f32[16,16], index: 3, kind: input, shape index: {}]
  %s4 = inlined_call_operand.vmem [shape: f32[16,8], index: 4, kind: input, shape index: {}]
  %s5 = inlined_call_operand.vmem [shape: f32[16,1], index: 5, kind: input, shape index: {}]
  %s6 = inlined_call_operand.vmem [shape: f32[8,16], index: 6, kind: input, shape index: {}]
  %s7 = inlined_call_operand.vmem [shape: f32[8,1], index: 7, kind: input, shape index: {}]
  %s8 = inlined_call_operand.vmem [shape: f32[8,1], index: 8, kind: input, shape index: {}]
  %s9 = inlined_call_operand.<no memory space> [shape: f32[1], index: 9, kind: input, shape index: {}]
  %s10 = inlined_call_operand.hbm [shape: f32[8,256], index: 10, kind: output, shape index: {}]
  %s11 = sld [smem:[#allocation0]]
  $region77: #{tpu_custom_call.1} parent=0
    _
  %s13 = ssub.s32 1, %s11
  %s14 = scalar_select 0, %s13, %s11
  %15 = sst [smem:[#allocation2]] %s9
  $region1: #{tpu_custom_call.1} parent=0
    #allocation3 [shape = 'u8[65536]{0}', space=vmem, size = 0x10000, scoped, tag = 'input window, operand 1']
    #allocation4 [shape = 's32[2]{0}', space=sflag, size = 0x8, scoped, tag = 'scoped memory for tpu_custom_call.1']
    #allocation5 [shape = 's32[2]{0}', space=sflag, size = 0x8, scoped, tag = 'scoped memory for tpu_custom_call.1']
    #allocation6 [shape = 'u8[8192]{0}', space=vmem, size = 0x2000, scoped, tag = 'output window, operand 0']
    %16 = vsyncpa [#allocation4], 0
    %s17 = scalar_lea.sflag [#allocation4], 1
    %18 = vsyncpa %s17, 0
    %19 = vsyncpa [#allocation5], 0
    %s20 = scalar_lea.sflag [#allocation5], 1
    %21 = vsyncpa %s20, 0
    loop: start=0, step=1, limit=4
    $region2: #{tpu_custom_call.1} parent=1 // loop_pre_header
      _
    $region3: #{tpu_custom_call.1} parent=1 // loop_header
      %s23 = sphi 0, %s27
      %p24 = scmp.ge.s32.totalorder %s23, 4
      %s33 = sphi 0, %s35
      %s36 = sphi 0, %s33
      %s37 = sphi 0, %s36
      %s53 = sphi 0, %s37
      %s59 = sphi 0, %s61
      %s62 = sphi 0, %s59
      %s63 = sphi 0, %s62
      %s79 = sphi 0, %s63
      %s85 = sphi 0, %s87
      %s88 = sphi 0, %s85
      %s89 = sphi 0, %s88
      %s105 = sphi 0, %s89
      %s109 = sphi 0, %s109
      %s111 = sphi 0, %s109
      %s112 = sphi 0, %s111
      %s126 = sphi 0, %s112
      %s130 = sphi 0, %s130
      %s132 = sphi 0, %s130
      %s133 = sphi 0, %s132
      %s147 = sphi 0, %s133
      %s151 = sphi 0, %s151
      %s153 = sphi 0, %s151
      %s154 = sphi 0, %s153
      %s168 = sphi 0, %s154
      %s172 = sphi 0, %s172
      %s174 = sphi 0, %s172
      %s175 = sphi 0, %s174
      %s189 = sphi 0, %s175
      %s193 = sphi 0, %s193
      %s195 = sphi 0, %s193
      %s196 = sphi 0, %s195
      %s210 = sphi 0, %s196
      %s214 = sphi 0, %s214
      %s216 = sphi 0, %s214
      %s217 = sphi 0, %s216
      %s231 = sphi 0, %s217
      %s235 = sphi 0, %s235
      %s237 = sphi 0, %s235
      %s238 = sphi 0, %s237
      %s252 = sphi 0, %s238
      %s258 = sphi 0, %s260
      %s261 = sphi 0, %s258
      %s262 = sphi 0, %s261
      %s278 = sphi 0, %s262
    $region4: #{tpu_custom_call.1} parent=1 // loop_header_branch
      %26 = sbr.rel (%p24) target = $region8
    $region5: #{tpu_custom_call.1} parent=1 // loop_body
      %s28 = ssub.s32 %s23, 1
      %s29 = ssub.s32 %s23, 2
      %s30 = sadd.s32 %s23, 1
      %s31 = ssub.s32 %s23, %s30
      %p32 = scmp.eq.s32.totalorder %s31, 0
      %s34 = sadd.s32 %s33, 1
      %s35 = scalar_select %p32, %s33, %s34
      %p38 = pneg %p32
      %p39 = scmp.eq.s32.totalorder %s23, 1
      %p40 = por %p38, %p39
      %p41 = scmp.ne.s32.totalorder %s33, %s36
      %p42 = scmp.eq.s32.totalorder %s23, 0
      %p43 = por %p41, %p42
      %p44 = scmp.ne.s32.totalorder %s33, %s36
      %p45 = scmp.eq.s32.totalorder %s28, 1
      %p46 = por %p44, %p45
      %p47 = scmp.ne.s32.totalorder %s36, %s37
      %p48 = scmp.eq.s32.totalorder %s28, 0
      %p49 = por %p47, %p48
      %p50 = scmp.ne.s32.totalorder %s36, %s37
      %p51 = scmp.eq.s32.totalorder %s29, 1
      %p52 = por %p50, %p51
      %p54 = scmp.ne.s32.totalorder %s37, %s53
      %p55 = scmp.eq.s32.totalorder %s29, 0
      %p56 = por %p54, %p55
      %s57 = ssub.s32 %s23, %s30
      %p58 = scmp.eq.s32.totalorder %s57, 0
      %s60 = sadd.s32 %s59, 1
      %s61 = scalar_select %p58, %s59, %s60
      %p64 = pneg %p58
      %p65 = scmp.eq.s32.totalorder %s23, 1
      %p66 = por %p64, %p65
      %p67 = scmp.ne.s32.totalorder %s59, %s62
      %p68 = scmp.eq.s32.totalorder %s23, 0
      %p69 = por %p67, %p68
      %p70 = scmp.ne.s32.totalorder %s59, %s62
      %p71 = scmp.eq.s32.totalorder %s28, 1
      %p72 = por %p70, %p71
      %p73 = scmp.ne.s32.totalorder %s62, %s63
      %p74 = scmp.eq.s32.totalorder %s28, 0
      %p75 = por %p73, %p74
      %p76 = scmp.ne.s32.totalorder %s62, %s63
      %p77 = scmp.eq.s32.totalorder %s29, 1
      %p78 = por %p76, %p77
      %p80 = scmp.ne.s32.totalorder %s63, %s79
      %p81 = scmp.eq.s32.totalorder %s29, 0
      %p82 = por %p80, %p81
      %s83 = ssub.s32 %s23, %s30
      %p84 = scmp.eq.s32.totalorder %s83, 0
      %s86 = sadd.s32 %s85, 1
      %s87 = scalar_select %p84, %s85, %s86
      %p90 = pneg %p84
      %p91 = scmp.eq.s32.totalorder %s23, 1
      %p92 = por %p90, %p91
      %p93 = scmp.ne.s32.totalorder %s85, %s88
      %p94 = scmp.eq.s32.totalorder %s23, 0
      %p95 = por %p93, %p94
      %p96 = scmp.ne.s32.totalorder %s85, %s88
      %p97 = scmp.eq.s32.totalorder %s28, 1
      %p98 = por %p96, %p97
      %p99 = scmp.ne.s32.totalorder %s88, %s89
      %p100 = scmp.eq.s32.totalorder %s28, 0
      %p101 = por %p99, %p100
      %p102 = scmp.ne.s32.totalorder %s88, %s89
      %p103 = scmp.eq.s32.totalorder %s29, 1
      %p104 = por %p102, %p103
      %p106 = scmp.ne.s32.totalorder %s89, %s105
      %p107 = scmp.eq.s32.totalorder %s29, 0
      %p108 = por %p106, %p107
      %s110 = sadd.s32 %s109, 1
      %p113 = scmp.eq.s32.totalorder %s23, 1
      %p114 = scmp.ne.s32.totalorder %s109, %s111
      %p115 = scmp.eq.s32.totalorder %s23, 0
      %p116 = por %p114, %p115
      %p117 = scmp.ne.s32.totalorder %s109, %s111
      %p118 = scmp.eq.s32.totalorder %s28, 1
      %p119 = por %p117, %p118
      %p120 = scmp.ne.s32.totalorder %s111, %s112
      %p121 = scmp.eq.s32.totalorder %s28, 0
      %p122 = por %p120, %p121
      %p123 = scmp.ne.s32.totalorder %s111, %s112
      %p124 = scmp.eq.s32.totalorder %s29, 1
      %p125 = por %p123, %p124
      %p127 = scmp.ne.s32.totalorder %s112, %s126
      %p128 = scmp.eq.s32.totalorder %s29, 0
      %p129 = por %p127, %p128
      %s131 = sadd.s32 %s130, 1
      %p134 = scmp.eq.s32.totalorder %s23, 1
      %p135 = scmp.ne.s32.totalorder %s130, %s132
      %p136 = scmp.eq.s32.totalorder %s23, 0
      %p137 = por %p135, %p136
      %p138 = scmp.ne.s32.totalorder %s130, %s132
      %p139 = scmp.eq.s32.totalorder %s28, 1
      %p140 = por %p138, %p139
      %p141 = scmp.ne.s32.totalorder %s132, %s133
      %p142 = scmp.eq.s32.totalorder %s28, 0
      %p143 = por %p141, %p142
      %p144 = scmp.ne.s32.totalorder %s132, %s133
      %p145 = scmp.eq.s32.totalorder %s29, 1
      %p146 = por %p144, %p145
      %p148 = scmp.ne.s32.totalorder %s133, %s147
      %p149 = scmp.eq.s32.totalorder %s29, 0
      %p150 = por %p148, %p149
      %s152 = sadd.s32 %s151, 1
      %p155 = scmp.eq.s32.totalorder %s23, 1
      %p156 = scmp.ne.s32.totalorder %s151, %s153
      %p157 = scmp.eq.s32.totalorder %s23, 0
      %p158 = por %p156, %p157
      %p159 = scmp.ne.s32.totalorder %s151, %s153
      %p160 = scmp.eq.s32.totalorder %s28, 1
      %p161 = por %p159, %p160
      %p162 = scmp.ne.s32.totalorder %s153, %s154
      %p163 = scmp.eq.s32.totalorder %s28, 0
      %p164 = por %p162, %p163
      %p165 = scmp.ne.s32.totalorder %s153, %s154
      %p166 = scmp.eq.s32.totalorder %s29, 1
      %p167 = por %p165, %p166
      %p169 = scmp.ne.s32.totalorder %s154, %s168
      %p170 = scmp.eq.s32.totalorder %s29, 0
      %p171 = por %p169, %p170
      %s173 = sadd.s32 %s172, 1
      %p176 = scmp.eq.s32.totalorder %s23, 1
      %p177 = scmp.ne.s32.totalorder %s172, %s174
      %p178 = scmp.eq.s32.totalorder %s23, 0
      %p179 = por %p177, %p178
      %p180 = scmp.ne.s32.totalorder %s172, %s174
      %p181 = scmp.eq.s32.totalorder %s28, 1
      %p182 = por %p180, %p181
      %p183 = scmp.ne.s32.totalorder %s174, %s175
      %p184 = scmp.eq.s32.totalorder %s28, 0
      %p185 = por %p183, %p184
      %p186 = scmp.ne.s32.totalorder %s174, %s175
      %p187 = scmp.eq.s32.totalorder %s29, 1
      %p188 = por %p186, %p187
      %p190 = scmp.ne.s32.totalorder %s175, %s189
      %p191 = scmp.eq.s32.totalorder %s29, 0
      %p192 = por %p190, %p191
      %s194 = sadd.s32 %s193, 1
      %p197 = scmp.eq.s32.totalorder %s23, 1
      %p198 = scmp.ne.s32.totalorder %s193, %s195
      %p199 = scmp.eq.s32.totalorder %s23, 0
      %p200 = por %p198, %p199
      %p201 = scmp.ne.s32.totalorder %s193, %s195
      %p202 = scmp.eq.s32.totalorder %s28, 1
      %p203 = por %p201, %p202
      %p204 = scmp.ne.s32.totalorder %s195, %s196
      %p205 = scmp.eq.s32.totalorder %s28, 0
      %p206 = por %p204, %p205
      %p207 = scmp.ne.s32.totalorder %s195, %s196
      %p208 = scmp.eq.s32.totalorder %s29, 1
      %p209 = por %p207, %p208
      %p211 = scmp.ne.s32.totalorder %s196, %s210
      %p212 = scmp.eq.s32.totalorder %s29, 0
      %p213 = por %p211, %p212
      %s215 = sadd.s32 %s214, 1
      %p218 = scmp.eq.s32.totalorder %s23, 1
      %p219 = scmp.ne.s32.totalorder %s214, %s216
      %p220 = scmp.eq.s32.totalorder %s23, 0
      %p221 = por %p219, %p220
      %p222 = scmp.ne.s32.totalorder %s214, %s216
      %p223 = scmp.eq.s32.totalorder %s28, 1
      %p224 = por %p222, %p223
      %p225 = scmp.ne.s32.totalorder %s216, %s217
      %p226 = scmp.eq.s32.totalorder %s28, 0
      %p227 = por %p225, %p226
      %p228 = scmp.ne.s32.totalorder %s216, %s217
      %p229 = scmp.eq.s32.totalorder %s29, 1
      %p230 = por %p228, %p229
      %p232 = scmp.ne.s32.totalorder %s217, %s231
      %p233 = scmp.eq.s32.totalorder %s29, 0
      %p234 = por %p232, %p233
      %s236 = sadd.s32 %s235, 1
      %p239 = scmp.eq.s32.totalorder %s23, 1
      %p240 = scmp.ne.s32.totalorder %s235, %s237
      %p241 = scmp.eq.s32.totalorder %s23, 0
      %p242 = por %p240, %p241
      %p243 = scmp.ne.s32.totalorder %s235, %s237
      %p244 = scmp.eq.s32.totalorder %s28, 1
      %p245 = por %p243, %p244
      %p246 = scmp.ne.s32.totalorder %s237, %s238
      %p247 = scmp.eq.s32.totalorder %s28, 0
      %p248 = por %p246, %p247
      %p249 = scmp.ne.s32.totalorder %s237, %s238
      %p250 = scmp.eq.s32.totalorder %s29, 1
      %p251 = por %p249, %p250
      %p253 = scmp.ne.s32.totalorder %s238, %s252
      %p254 = scmp.eq.s32.totalorder %s29, 0
      %p255 = por %p253, %p254
      %s256 = ssub.s32 %s23, %s30
      %p257 = scmp.eq.s32.totalorder %s256, 0
      %s259 = sadd.s32 %s258, 1
      %s260 = scalar_select %p257, %s258, %s259
      %p263 = pneg %p257
      %p264 = scmp.eq.s32.totalorder %s23, 1
      %p265 = por %p263, %p264
      %p266 = scmp.ne.s32.totalorder %s258, %s261
      %p267 = scmp.eq.s32.totalorder %s23, 0
      %p268 = por %p266, %p267
      %p269 = scmp.ne.s32.totalorder %s258, %s261
      %p270 = scmp.eq.s32.totalorder %s28, 1
      %p271 = por %p269, %p270
      %p272 = scmp.ne.s32.totalorder %s261, %s262
      %p273 = scmp.eq.s32.totalorder %s28, 0
      %p274 = por %p272, %p273
      %p275 = scmp.ne.s32.totalorder %s261, %s262
      %p276 = scmp.eq.s32.totalorder %s29, 1
      %p277 = por %p275, %p276
      %p279 = scmp.ne.s32.totalorder %s262, %s278
      %p280 = scmp.eq.s32.totalorder %s29, 0
      %p281 = por %p279, %p280
      %p282 = scmp.le.s32.totalorder 1, %s23
      %p283 = scmp.lt.s32.totalorder %s23, 3
      %p284 = pnand %p282, %p283
      %p285 = pneg %p284
      // Predicated region
      $region9: #{tpu_custom_call.1} parent=5 // pred_check
        _
      $region10: #{tpu_custom_call.1} parent=5 // pred_check_branch
        %287 = sbr.rel (%p284) target = $region12
      $region11: #{tpu_custom_call.1} parent=5 // pred_region
        %s288 = ssub.s32 %s23, 1
        // Predicated region
        $region13: #{tpu_custom_call.1} parent=11 // pred_check
          %p289 = pneg %p122
        $region14: #{tpu_custom_call.1} parent=11 // pred_check_branch
          %291 = sbr.rel (%p289) target = $region16
        $region15: #{tpu_custom_call.1} parent=11 // pred_region
          _
        $region16: #{tpu_custom_call.1} parent=11 // pred_fallthru
          _
        // Predicated region
        $region17: #{tpu_custom_call.1} parent=11 // pred_check
          %p292 = pneg %p143
        $region18: #{tpu_custom_call.1} parent=11 // pred_check_branch
          %294 = sbr.rel (%p292) target = $region20
        $region19: #{tpu_custom_call.1} parent=11 // pred_region
          _
        $region20: #{tpu_custom_call.1} parent=11 // pred_fallthru
          _
        // Predicated region
        $region21: #{tpu_custom_call.1} parent=11 // pred_check
          %p295 = pneg %p164
        $region22: #{tpu_custom_call.1} parent=11 // pred_check_branch
          %297 = sbr.rel (%p295) target = $region24
        $region23: #{tpu_custom_call.1} parent=11 // pred_region
          _
        $region24: #{tpu_custom_call.1} parent=11 // pred_fallthru
          _
        // Predicated region
        $region25: #{tpu_custom_call.1} parent=11 // pred_check
          %p298 = pneg %p185
        $region26: #{tpu_custom_call.1} parent=11 // pred_check_branch
          %300 = sbr.rel (%p298) target = $region28
        $region27: #{tpu_custom_call.1} parent=11 // pred_region
          _
        $region28: #{tpu_custom_call.1} parent=11 // pred_fallthru
          _
        // Predicated region
        $region29: #{tpu_custom_call.1} parent=11 // pred_check
          %p301 = pneg %p206
        $region30: #{tpu_custom_call.1} parent=11 // pred_check_branch
          %303 = sbr.rel (%p301) target = $region32
        $region31: #{tpu_custom_call.1} parent=11 // pred_region
          _
        $region32: #{tpu_custom_call.1} parent=11 // pred_fallthru
          _
        // Predicated region
        $region33: #{tpu_custom_call.1} parent=11 // pred_check
          %p304 = pneg %p227
        $region34: #{tpu_custom_call.1} parent=11 // pred_check_branch
          %306 = sbr.rel (%p304) target = $region36
        $region35: #{tpu_custom_call.1} parent=11 // pred_region
          _
        $region36: #{tpu_custom_call.1} parent=11 // pred_fallthru
          _
        // Predicated region
        $region37: #{tpu_custom_call.1} parent=11 // pred_check
          %p307 = pneg %p248
        $region38: #{tpu_custom_call.1} parent=11 // pred_check_branch
          %309 = sbr.rel (%p307) target = $region40
        $region39: #{tpu_custom_call.1} parent=11 // pred_region
          _
        $region40: #{tpu_custom_call.1} parent=11 // pred_fallthru
          _
      $region12: #{tpu_custom_call.1} parent=5 // pred_fallthru
        _
      %p310 = scmp.lt.s32.totalorder %s23, 2
      // Predicated region
      $region41: #{tpu_custom_call.1} parent=5 // pred_check
        %p311 = pneg %p310
      $region42: #{tpu_custom_call.1} parent=5 // pred_check_branch
        %313 = sbr.rel (%p311) target = $region44
      $region43: #{tpu_custom_call.1} parent=5 // pred_region
        // Predicated region
        $region45: #{tpu_custom_call.1} parent=43 // pred_check
          %p314 = pneg %p43
        $region46: #{tpu_custom_call.1} parent=43 // pred_check_branch
          %316 = sbr.rel (%p314) target = $region48
        $region47: #{tpu_custom_call.1} parent=43 // pred_region
          %p317 = scmp.lt.s32.totalorder %s23, 1
          %s318 = scalar_select %p317, %s23, 1
          %s319 = smul.addr %s318, 8
          %s320 = scalar_lea.vmem %s0, %s319
        $region48: #{tpu_custom_call.1} parent=43 // pred_fallthru
          _
        // Predicated region
        $region49: #{tpu_custom_call.1} parent=43 // pred_check
          %p321 = pneg %p69
        $region50: #{tpu_custom_call.1} parent=43 // pred_check_branch
          %323 = sbr.rel (%p321) target = $region52
        $region51: #{tpu_custom_call.1} parent=43 // pred_region
          %s324 = sand.u32 %s59, 1
          %s325 = scalar_lea.sflag [#allocation4], %s324
          %s326 = sand.u32 %s59, 1
          %s327 = smul.addr %s326, 64
          %s328 = scalar_lea.vmem [#allocation3], %s327
          %s330 = ssub.s32 1024, 1024
          %331 = vsyncadd %s325, %s330
          %s332 = smul.addr %s23, 128
          %s333 = scalar_lea.hbm %s1, %s332
          %s334 = sshll.u32 %s328, 4
          %s335 = int_to_ptr.vmem [resolvable:$true] %s334
          %340 = dma.hbm_to_vmem [thread:$0]  %s333, 1024, %s335, %s325, 256, 128, 8
        $region52: #{tpu_custom_call.1} parent=43 // pred_fallthru
          _
        // Predicated region
        $region53: #{tpu_custom_call.1} parent=43 // pred_check
          %p341 = pneg %p95
        $region54: #{tpu_custom_call.1} parent=43 // pred_check_branch
          %343 = sbr.rel (%p341) target = $region56
        $region55: #{tpu_custom_call.1} parent=43 // pred_region
          %p344 = scmp.lt.s32.totalorder %s23, 1
          %s345 = scalar_select %p344, %s23, 1
          %s346 = smul.addr %s345, 8
          %s347 = scalar_lea.vmem %s2, %s346
        $region56: #{tpu_custom_call.1} parent=43 // pred_fallthru
          _
      $region44: #{tpu_custom_call.1} parent=5 // pred_fallthru
        _
      %p348 = scmp.le.s32.totalorder 1, %s23
      %p349 = scmp.lt.s32.totalorder %s23, 3
      %p350 = pnand %p348, %p349
      %p351 = pneg %p350
      // Predicated region
      $region57: #{tpu_custom_call.1} parent=5 // pred_check
        _
      $region58: #{tpu_custom_call.1} parent=5 // pred_check_branch
        %353 = sbr.rel (%p350) target = $region60
      $region59: #{tpu_custom_call.1} parent=5 // pred_region
        %s354 = ssub.s32 %s23, 1
        %s355 = sand.u32 %s62, 1
        %s356 = scalar_lea.sflag [#allocation4], %s355
        %s357 = sand.u32 %s62, 1
        %s358 = smul.addr %s357, 64
        %s359 = scalar_lea.vmem [#allocation3], %s358
        // Predicated region
        $region61: #{tpu_custom_call.1} parent=59 // pred_check
          %p360 = pneg %p75
        $region62: #{tpu_custom_call.1} parent=59 // pred_check_branch
          %362 = sbr.rel (%p360) target = $region64
        $region63: #{tpu_custom_call.1} parent=59 // pred_region
          %363 = dma.done %s356, 1024
        $region64: #{tpu_custom_call.1} parent=59 // pred_fallthru
          _
        %p364 = scmp.lt.s32.totalorder %s28, 1
        %s365 = scalar_select %p364, %s28, 1
        %s366 = smul.addr %s365, 8
        %s367 = scalar_lea.vmem %s0, %s366
        %p368 = pneg %p49
        %p369 = pneg %p46
        %s370 = sand.u32 %s62, 1
        %s371 = scalar_lea.sflag [#allocation4], %s370
        %s372 = sand.u32 %s62, 1
        %s373 = smul.addr %s372, 64
        %s374 = scalar_lea.vmem [#allocation3], %s373
        %p375 = pneg %p75
        %p376 = pneg %p72
        %p377 = scmp.lt.s32.totalorder %s28, 1
        %s378 = scalar_select %p377, %s28, 1
        %s379 = smul.addr %s378, 8
        %s380 = scalar_lea.vmem %s2, %s379
        %p381 = pneg %p101
        %p382 = pneg %p98
        %p383 = pneg %p122
        %p384 = pneg %p119
        %p385 = pneg %p143
        %p386 = pneg %p140
        %p387 = pneg %p164
        %p388 = pneg %p161
        %p389 = pneg %p185
        %p390 = pneg %p182
        %p391 = pneg %p206
        %p392 = pneg %p203
        %p393 = pneg %p227
        %p394 = pneg %p224
        %p395 = pneg %p248
        %p396 = pneg %p245
        %p397 = pneg %p274
        %p398 = pneg %p271
        %s399 = sand.u32 %s261, 1
        %s400 = scalar_lea.sflag [#allocation5], %s399
        %s401 = sand.u32 %s261, 1
        %s402 = smul.addr %s401, 8
        %s403 = scalar_lea.vmem [#allocation6], %s402
        %p404 = scmp.lt.s32.totalorder %s28, 1
        %s405 = scalar_select %p404, %s28, 1
        %s406 = smul.addr %s405, 8
        %s407 = scalar_lea.vmem %s0, %s406
        %p408 = scmp.lt.s32.totalorder %s28, 1
        %s409 = scalar_select %p408, %s28, 1
        %s410 = smul.addr %s409, 8
        %s411 = scalar_lea.vmem %s2, %s410
        %v412 = vld [vmem:[%s407] sm:$0xff]
        %v413 = vld [vmem:[%s359] sm:$0xff]
        %v414 = vld [vmem:[%s359 + $0x8] sm:$0xff]
        %v415 = vld [vmem:[%s359 + $0x10] sm:$0xff]
        %v416 = vld [vmem:[%s359 + $0x18] sm:$0xff]
        %v417 = vld [vmem:[%s359 + $0x20] sm:$0xff]
        %v418 = vld [vmem:[%s359 + $0x28] sm:$0xff]
        %v419 = vld [vmem:[%s359 + $0x30] sm:$0xff]
        %v420 = vld [vmem:[%s359 + $0x38] sm:$0xff]
        %v421 = vld [vmem:[%s411] sm:$0xff]
        %v422 = vmul.f32 %v413, %v412
        %v423 = vmul.f32 %v414, %v412
        %v424 = vmul.f32 %v415, %v412
        %v425 = vmul.f32 %v416, %v412
        %v426 = vmul.f32 %v417, %v412
        %v427 = vmul.f32 %v418, %v412
        %v428 = vmul.f32 %v419, %v412
        %v429 = vmul.f32 %v420, %v412
        %v430 = vld [vmem:[%s3] sm:$0xff]
        %v431 = vld [vmem:[%s3 + $0x8] sm:$0xff]
        %v432 = vld [vmem:[%s4] sm:$0xff]
        %v433 = vld [vmem:[%s4 + $0x8] sm:$0xff]
        %v434 = vld [vmem:[%s5] sm:$0xff]
        %v435 = vld [vmem:[%s5 + $0x8] sm:$0xff]
        %437 = vset.pattern.permute.xlu0 0
        %438 = vperm.xlu0 %437, %v434
        %v439 = vpop.permute.xlu0 %438
        %442 = vset.pattern.permute.xlu0 0
        %443 = vperm.xlu0 %442, %v435
        %v444 = vpop.permute.xlu0 %443
        %vm446 = vcmask 64512
        %v448 = vsel %vm446, %v432, 0
        %v451 = vsel %vm446, %v433, 0
        %453 = vmatprep.subr.mxu0 0.0
        %454 = vmatpush1.msra.mxu0 %v412
        %455 = vmatprep.subr.mxu0 0.0
        %456 = vmatpush1.msra.mxu0 0.0
        %457 = vmatprep.subr.mxu0 0.0
        %458 = vmatpush1.msra.mxu0 0.0
        %459 = vmatprep.subr.mxu0 0.0
        %460 = vmatpush1.msra.mxu0 0.0
        %461 = vmatprep.subr.mxu0 0.0
        %462 = vmatpush1.msra.mxu0 0.0
        %463 = vmatprep.subr.mxu0 0.0
        %464 = vmatpush1.msra.mxu0 0.0
        %465 = vmatprep.subr.mxu0 0.0
        %466 = vmatpush1.msra.mxu0 0.0
        %467 = vmatprep.subr.mxu0 0.0
        %468 = vmatpush1.msra.mxu0 0.0
        %469 = vmatprep.subr.mxu0 0.0
        %470 = vmatpush1.msra.mxu0 0.0
        %471 = vmatprep.subr.mxu0 0.0
        %472 = vmatpush1.msra.mxu0 0.0
        %473 = vmatprep.subr.mxu0 0.0
        %474 = vmatpush1.msra.mxu0 0.0
        %475 = vmatprep.subr.mxu0 0.0
        %476 = vmatpush1.msra.mxu0 0.0
        %477 = vmatprep.subr.mxu0 0.0
        %478 = vmatpush1.msra.mxu0 0.0
        %479 = vmatprep.subr.mxu0 0.0
        %480 = vmatpush1.msra.mxu0 0.0
        %481 = vmatprep.subr.mxu0 0.0
        %482 = vmatpush1.msra.mxu0 0.0
        %483 = vmatprep.subr.mxu0 0.0
        %484 = vmatpush1.msra.mxu0 0.0
        %485 = vmatprep.subr.mxu0 0.0
        %486 = vmatpush1.msra.mxu0 0.0
        %487 = vmatprep.subr.mxu0 0.0
        %488 = vmatpush1.msra.mxu0 0.0
        %489 = vmatprep.subr.mxu0 0.0
        %490 = vmatpush1.msra.mxu0 0.0
        %491 = vmatprep.subr.mxu0 0.0
        %492 = vmatpush1.msra.mxu0 0.0
        %493 = vmatprep.subr.mxu0 0.0
        %494 = vmatpush1.msra.mxu0 0.0
        %495 = vmatprep.subr.mxu0 0.0
        %496 = vmatpush1.msra.mxu0 0.0
        %497 = vmatprep.subr.mxu0 0.0
        %498 = vmatpush1.msra.mxu0 0.0
        %499 = vmatprep.subr.mxu0 0.0
        %500 = vmatpush1.msra.mxu0 0.0
        %501 = vmatprep.subr.mxu0 0.0
        %502 = vmatpush1.msra.mxu0 0.0
        %503 = vmatprep.subr.mxu0 0.0
        %504 = vmatpush1.msra.mxu0 0.0
        %505 = vmatprep.subr.mxu0 0.0
        %506 = vmatpush1.msra.mxu0 0.0
        %507 = vmatprep.subr.mxu0 0.0
        %508 = vmatpush1.msra.mxu0 0.0
        %509 = vmatprep.subr.mxu0 0.0
        %510 = vmatpush1.msra.mxu0 0.0
        %511 = vmatprep.subr.mxu0 0.0
        %512 = vmatpush1.msra.mxu0 0.0
        %513 = vmatprep.subr.mxu0 0.0
        %514 = vmatpush1.msra.mxu0 0.0
        %515 = vmatprep.subr.mxu0 0.0
        %516 = vmatpush1.msra.mxu0 0.0
        %517 = vmatprep.mubr.f32.mxu0 0.0
        %518 = vmatmul.mubr.f32.gmra.mrb[0].mxu0 %v448
        %v519 = vpop.f32.mrb[0].mxu0
        %v520 = vadd.f32 %v439, %v519
        %v521 = vpop.f32.mrb[0].mxu0
        %522 = vmatprep.mubr.f32.mxu0 0.0
        %523 = vmatmul.mubr.f32.gmra.mrb[0].mxu0 %v451
        %v524 = vpop.f32.mrb[0].mxu0
        %v525 = vadd.f32 %v444, %v524
        %v526 = vpop.f32.mrb[0].mxu0
        %527 = vdwg.mxu0
        %vm528 = vcmask 130048
        %v530 = vsel %vm528, %v430, 0
        %v533 = vsel %vm528, %v431, 0
        %535 = vmatprep.subr.mxu0 0.0
        %536 = vmatpush1.msra.mxu0 %v413
        %537 = vmatprep.subr.mxu0 0.0
        %538 = vmatpush1.msra.mxu0 %v422
        %539 = vmatprep.subr.mxu0 0.0
        %540 = vmatpush1.msra.mxu0 0.0
        %541 = vmatprep.subr.mxu0 0.0
        %542 = vmatpush1.msra.mxu0 0.0
        %543 = vmatprep.subr.mxu0 0.0
        %544 = vmatpush1.msra.mxu0 0.0
        %545 = vmatprep.subr.mxu0 0.0
        %546 = vmatpush1.msra.mxu0 0.0
        %547 = vmatprep.subr.mxu0 0.0
        %548 = vmatpush1.msra.mxu0 0.0
        %549 = vmatprep.subr.mxu0 0.0
        %550 = vmatpush1.msra.mxu0 0.0
        %551 = vmatprep.subr.mxu0 0.0
        %552 = vmatpush1.msra.mxu0 0.0
        %553 = vmatprep.subr.mxu0 0.0
        %554 = vmatpush1.msra.mxu0 0.0
        %555 = vmatprep.subr.mxu0 0.0
        %556 = vmatpush1.msra.mxu0 0.0
        %557 = vmatprep.subr.mxu0 0.0
        %558 = vmatpush1.msra.mxu0 0.0
        %559 = vmatprep.subr.mxu0 0.0
        %560 = vmatpush1.msra.mxu0 0.0
        %561 = vmatprep.subr.mxu0 0.0
        %562 = vmatpush1.msra.mxu0 0.0
        %563 = vmatprep.subr.mxu0 0.0
        %564 = vmatpush1.msra.mxu0 0.0
        %565 = vmatprep.subr.mxu0 0.0
        %566 = vmatpush1.msra.mxu0 0.0
        %567 = vmatprep.subr.mxu0 0.0
        %568 = vmatpush1.msra.mxu0 0.0
        %569 = vmatprep.subr.mxu0 0.0
        %570 = vmatpush1.msra.mxu0 0.0
        %571 = vmatprep.subr.mxu0 0.0
        %572 = vmatpush1.msra.mxu0 0.0
        %573 = vmatprep.subr.mxu0 0.0
        %574 = vmatpush1.msra.mxu0 0.0
        %575 = vmatprep.subr.mxu0 0.0
        %576 = vmatpush1.msra.mxu0 0.0
        %577 = vmatprep.subr.mxu0 0.0
        %578 = vmatpush1.msra.mxu0 0.0
        %579 = vmatprep.subr.mxu0 0.0
        %580 = vmatpush1.msra.mxu0 0.0
        %581 = vmatprep.subr.mxu0 0.0
        %582 = vmatpush1.msra.mxu0 0.0
        %583 = vmatprep.subr.mxu0 0.0
        %584 = vmatpush1.msra.mxu0 0.0
        %585 = vmatprep.subr.mxu0 0.0
        %586 = vmatpush1.msra.mxu0 0.0
        %587 = vmatprep.subr.mxu0 0.0
        %588 = vmatpush1.msra.mxu0 0.0
        %589 = vmatprep.subr.mxu0 0.0
        %590 = vmatpush1.msra.mxu0 0.0
        %591 = vmatprep.subr.mxu0 0.0
        %592 = vmatpush1.msra.mxu0 0.0
        %593 = vmatprep.subr.mxu0 0.0
        %594 = vmatpush1.msra.mxu0 0.0
        %595 = vmatprep.subr.mxu0 0.0
        %596 = vmatpush1.msra.mxu0 0.0
        %597 = vmatprep.subr.mxu0 0.0
        %598 = vmatpush1.msra.mxu0 0.0
        %599 = vmatprep.mubr.f32.mxu0 0.0
        %600 = vmatmul.mubr.f32.gmra.mrb[0].mxu0 %v530
        %v601 = vpop.f32.mrb[0].mxu0
        %v602 = vadd.f32 %v520, %v601
        %v603 = vpop.f32.mrb[0].mxu0
        %604 = vmatprep.mubr.f32.mxu0 0.0
        %605 = vmatmul.mubr.f32.gmra.mrb[0].mxu0 %v533
        %v606 = vpop.f32.mrb[0].mxu0
        %v607 = vadd.f32 %v525, %v606
        %v608 = vpop.f32.mrb[0].mxu0
        %609 = vdwg.mxu0
        %610 = vmatprep.subr.mxu0 0.0
        %611 = vmatpush1.msra.mxu0 %v414
        %612 = vmatprep.subr.mxu0 0.0
        %613 = vmatpush1.msra.mxu0 %v423
        %614 = vmatprep.subr.mxu0 0.0
        %615 = vmatpush1.msra.mxu0 0.0
        %616 = vmatprep.subr.mxu0 0.0
        %617 = vmatpush1.msra.mxu0 0.0
        %618 = vmatprep.subr.mxu0 0.0
        %619 = vmatpush1.msra.mxu0 0.0
        %620 = vmatprep.subr.mxu0 0.0
        %621 = vmatpush1.msra.mxu0 0.0
        %622 = vmatprep.subr.mxu0 0.0
        %623 = vmatpush1.msra.mxu0 0.0
        %624 = vmatprep.subr.mxu0 0.0
        %625 = vmatpush1.msra.mxu0 0.0
        %626 = vmatprep.subr.mxu0 0.0
        %627 = vmatpush1.msra.mxu0 0.0
        %628 = vmatprep.subr.mxu0 0.0
        %629 = vmatpush1.msra.mxu0 0.0
        %630 = vmatprep.subr.mxu0 0.0
        %631 = vmatpush1.msra.mxu0 0.0
        %632 = vmatprep.subr.mxu0 0.0
        %633 = vmatpush1.msra.mxu0 0.0
        %634 = vmatprep.subr.mxu0 0.0
        %635 = vmatpush1.msra.mxu0 0.0
        %636 = vmatprep.subr.mxu0 0.0
        %637 = vmatpush1.msra.mxu0 0.0
        %638 = vmatprep.subr.mxu0 0.0
        %639 = vmatpush1.msra.mxu0 0.0
        %640 = vmatprep.subr.mxu0 0.0
        %641 = vmatpush1.msra.mxu0 0.0
        %642 = vmatprep.subr.mxu0 0.0
        %643 = vmatpush1.msra.mxu0 0.0
        %644 = vmatprep.subr.mxu0 0.0
        %645 = vmatpush1.msra.mxu0 0.0
        %646 = vmatprep.subr.mxu0 0.0
        %647 = vmatpush1.msra.mxu0 0.0
        %648 = vmatprep.subr.mxu0 0.0
        %649 = vmatpush1.msra.mxu0 0.0
        %650 = vmatprep.subr.mxu0 0.0
        %651 = vmatpush1.msra.mxu0 0.0
        %652 = vmatprep.subr.mxu0 0.0
        %653 = vmatpush1.msra.mxu0 0.0
        %654 = vmatprep.subr.mxu0 0.0
        %655 = vmatpush1.msra.mxu0 0.0
        %656 = vmatprep.subr.mxu0 0.0
        %657 = vmatpush1.msra.mxu0 0.0
        %658 = vmatprep.subr.mxu0 0.0
        %659 = vmatpush1.msra.mxu0 0.0
        %660 = vmatprep.subr.mxu0 0.0
        %661 = vmatpush1.msra.mxu0 0.0
        %662 = vmatprep.subr.mxu0 0.0
        %663 = vmatpush1.msra.mxu0 0.0
        %664 = vmatprep.subr.mxu0 0.0
        %665 = vmatpush1.msra.mxu0 0.0
        %666 = vmatprep.subr.mxu0 0.0
        %667 = vmatpush1.msra.mxu0 0.0
        %668 = vmatprep.subr.mxu0 0.0
        %669 = vmatpush1.msra.mxu0 0.0
        %670 = vmatprep.subr.mxu0 0.0
        %671 = vmatpush1.msra.mxu0 0.0
        %672 = vmatprep.subr.mxu0 0.0
        %673 = vmatpush1.msra.mxu0 0.0
        %674 = vmatprep.mubr.f32.mxu0 0.0
        %675 = vmatmul.mubr.f32.gmra.mrb[0].mxu0 %v530
        %v676 = vpop.f32.mrb[0].mxu0
        %v677 = vadd.f32 %v520, %v676
        %v678 = vpop.f32.mrb[0].mxu0
        %679 = vmatprep.mubr.f32.mxu0 0.0
        %680 = vmatmul.mubr.f32.gmra.mrb[0].mxu0 %v533
        %v681 = vpop.f32.mrb[0].mxu0
        %v682 = vadd.f32 %v525, %v681
        %v683 = vpop.f32.mrb[0].mxu0
        %684 = vdwg.mxu0
        %685 = vmatprep.subr.mxu0 0.0
        %686 = vmatpush1.msra.mxu0 %v415
        %687 = vmatprep.subr.mxu0 0.0
        %688 = vmatpush1.msra.mxu0 %v424
        %689 = vmatprep.subr.mxu0 0.0
        %690 = vmatpush1.msra.mxu0 0.0
        %691 = vmatprep.subr.mxu0 0.0
        %692 = vmatpush1.msra.mxu0 0.0
        %693 = vmatprep.subr.mxu0 0.0
        %694 = vmatpush1.msra.mxu0 0.0
        %695 = vmatprep.subr.mxu0 0.0
        %696 = vmatpush1.msra.mxu0 0.0
        %697 = vmatprep.subr.mxu0 0.0
        %698 = vmatpush1.msra.mxu0 0.0
        %699 = vmatprep.subr.mxu0 0.0
        %700 = vmatpush1.msra.mxu0 0.0
        %701 = vmatprep.subr.mxu0 0.0
        %702 = vmatpush1.msra.mxu0 0.0
        %703 = vmatprep.subr.mxu0 0.0
        %704 = vmatpush1.msra.mxu0 0.0
        %705 = vmatprep.subr.mxu0 0.0
        %706 = vmatpush1.msra.mxu0 0.0
        %707 = vmatprep.subr.mxu0 0.0
        %708 = vmatpush1.msra.mxu0 0.0
        %709 = vmatprep.subr.mxu0 0.0
        %710 = vmatpush1.msra.mxu0 0.0
        %711 = vmatprep.subr.mxu0 0.0
        %712 = vmatpush1.msra.mxu0 0.0
        %713 = vmatprep.subr.mxu0 0.0
        %714 = vmatpush1.msra.mxu0 0.0
        %715 = vmatprep.subr.mxu0 0.0
        %716 = vmatpush1.msra.mxu0 0.0
        %717 = vmatprep.subr.mxu0 0.0
        %718 = vmatpush1.msra.mxu0 0.0
        %719 = vmatprep.subr.mxu0 0.0
        %720 = vmatpush1.msra.mxu0 0.0
        %721 = vmatprep.subr.mxu0 0.0
        %722 = vmatpush1.msra.mxu0 0.0
        %723 = vmatprep.subr.mxu0 0.0
        %724 = vmatpush1.msra.mxu0 0.0
        %725 = vmatprep.subr.mxu0 0.0
        %726 = vmatpush1.msra.mxu0 0.0
        %727 = vmatprep.subr.mxu0 0.0
        %728 = vmatpush1.msra.mxu0 0.0
        %729 = vmatprep.subr.mxu0 0.0
        %730 = vmatpush1.msra.mxu0 0.0
        %731 = vmatprep.subr.mxu0 0.0
        %732 = vmatpush1.msra.mxu0 0.0
        %733 = vmatprep.subr.mxu0 0.0
        %734 = vmatpush1.msra.mxu0 0.0
        %735 = vmatprep.subr.mxu0 0.0
        %736 = vmatpush1.msra.mxu0 0.0
        %737 = vmatprep.subr.mxu0 0.0
        %738 = vmatpush1.msra.mxu0 0.0
        %739 = vmatprep.subr.mxu0 0.0
        %740 = vmatpush1.msra.mxu0 0.0
        %741 = vmatprep.subr.mxu0 0.0
        %742 = vmatpush1.msra.mxu0 0.0
        %743 = vmatprep.subr.mxu0 0.0
        %744 = vmatpush1.msra.mxu0 0.0
        %745 = vmatprep.subr.mxu0 0.0
        %746 = vmatpush1.msra.mxu0 0.0
        %747 = vmatprep.subr.mxu0 0.0
        %748 = vmatpush1.msra.mxu0 0.0
        %749 = vmatprep.mubr.f32.mxu0 0.0
        %750 = vmatmul.mubr.f32.gmra.mrb[0].mxu0 %v530
        %v751 = vpop.f32.mrb[0].mxu0
        %v752 = vadd.f32 %v520, %v751
        %v753 = vpop.f32.mrb[0].mxu0
        %754 = vmatprep.mubr.f32.mxu0 0.0
        %755 = vmatmul.mubr.f32.gmra.mrb[0].mxu0 %v533
        %v756 = vpop.f32.mrb[0].mxu0
        %v757 = vadd.f32 %v525, %v756
        %v758 = vpop.f32.mrb[0].mxu0
        %759 = vdwg.mxu0
        %760 = vmatprep.subr.mxu0 0.0
        %761 = vmatpush1.msra.mxu0 %v416
        %762 = vmatprep.subr.mxu0 0.0
        %763 = vmatpush1.msra.mxu0 %v425
        %764 = vmatprep.subr.mxu0 0.0
        %765 = vmatpush1.msra.mxu0 0.0
        %766 = vmatprep.subr.mxu0 0.0
        %767 = vmatpush1.msra.mxu0 0.0
        %768 = vmatprep.subr.mxu0 0.0
        %769 = vmatpush1.msra.mxu0 0.0
        %770 = vmatprep.subr.mxu0 0.0
        %771 = vmatpush1.msra.mxu0 0.0
        %772 = vmatprep.subr.mxu0 0.0
        %773 = vmatpush1.msra.mxu0 0.0
        %774 = vmatprep.subr.mxu0 0.0
        %775 = vmatpush1.msra.mxu0 0.0
        %776 = vmatprep.subr.mxu0 0.0
        %777 = vmatpush1.msra.mxu0 0.0
        %778 = vmatprep.subr.mxu0 0.0
        %779 = vmatpush1.msra.mxu0 0.0
        %780 = vmatprep.subr.mxu0 0.0
        %781 = vmatpush1.msra.mxu0 0.0
        %782 = vmatprep.subr.mxu0 0.0
        %783 = vmatpush1.msra.mxu0 0.0
        %784 = vmatprep.subr.mxu0 0.0
        %785 = vmatpush1.msra.mxu0 0.0
        %786 = vmatprep.subr.mxu0 0.0
        %787 = vmatpush1.msra.mxu0 0.0
        %788 = vmatprep.subr.mxu0 0.0
        %789 = vmatpush1.msra.mxu0 0.0
        %790 = vmatprep.subr.mxu0 0.0
        %791 = vmatpush1.msra.mxu0 0.0
        %792 = vmatprep.subr.mxu0 0.0
        %793 = vmatpush1.msra.mxu0 0.0
        %794 = vmatprep.subr.mxu0 0.0
        %795 = vmatpush1.msra.mxu0 0.0
        %796 = vmatprep.subr.mxu0 0.0
        %797 = vmatpush1.msra.mxu0 0.0
        %798 = vmatprep.subr.mxu0 0.0
        %799 = vmatpush1.msra.mxu0 0.0
        %800 = vmatprep.subr.mxu0 0.0
        %801 = vmatpush1.msra.mxu0 0.0
        %802 = vmatprep.subr.mxu0 0.0
        %803 = vmatpush1.msra.mxu0 0.0
        %804 = vmatprep.subr.mxu0 0.0
        %805 = vmatpush1.msra.mxu0 0.0
        %806 = vmatprep.subr.mxu0 0.0
        %807 = vmatpush1.msra.mxu0 0.0
        %808 = vmatprep.subr.mxu0 0.0
        %809 = vmatpush1.msra.mxu0 0.0
        %810 = vmatprep.subr.mxu0 0.0
        %811 = vmatpush1.msra.mxu0 0.0
        %812 = vmatprep.subr.mxu0 0.0
        %813 = vmatpush1.msra.mxu0 0.0
        %814 = vmatprep.subr.mxu0 0.0
        %815 = vmatpush1.msra.mxu0 0.0
        %816 = vmatprep.subr.mxu0 0.0
        %817 = vmatpush1.msra.mxu0 0.0
        %818 = vmatprep.subr.mxu0 0.0
        %819 = vmatpush1.msra.mxu0 0.0
        %820 = vmatprep.subr.mxu0 0.0
        %821 = vmatpush1.msra.mxu0 0.0
        %822 = vmatprep.subr.mxu0 0.0
        %823 = vmatpush1.msra.mxu0 0.0
        %824 = vmatprep.mubr.f32.mxu0 0.0
        %825 = vmatmul.mubr.f32.gmra.mrb[0].mxu0 %v530
        %v826 = vpop.f32.mrb[0].mxu0
        %v827 = vadd.f32 %v520, %v826
        %v828 = vpop.f32.mrb[0].mxu0
        %829 = vmatprep.mubr.f32.mxu0 0.0
        %830 = vmatmul.mubr.f32.gmra.mrb[0].mxu0 %v533
        %v831 = vpop.f32.mrb[0].mxu0
        %v832 = vadd.f32 %v525, %v831
        %v833 = vpop.f32.mrb[0].mxu0
        %834 = vdwg.mxu0
        %835 = vmatprep.subr.mxu0 0.0
        %836 = vmatpush1.msra.mxu0 %v417
        %837 = vmatprep.subr.mxu0 0.0
        %838 = vmatpush1.msra.mxu0 %v426
        %839 = vmatprep.subr.mxu0 0.0
        %840 = vmatpush1.msra.mxu0 0.0
        %841 = vmatprep.subr.mxu0 0.0
        %842 = vmatpush1.msra.mxu0 0.0
        %843 = vmatprep.subr.mxu0 0.0
        %844 = vmatpush1.msra.mxu0 0.0
        %845 = vmatprep.subr.mxu0 0.0
        %846 = vmatpush1.msra.mxu0 0.0
        %847 = vmatprep.subr.mxu0 0.0
        %848 = vmatpush1.msra.mxu0 0.0
        %849 = vmatprep.subr.mxu0 0.0
        %850 = vmatpush1.msra.mxu0 0.0
        %851 = vmatprep.subr.mxu0 0.0
        %852 = vmatpush1.msra.mxu0 0.0
        %853 = vmatprep.subr.mxu0 0.0
        %854 = vmatpush1.msra.mxu0 0.0
        %855 = vmatprep.subr.mxu0 0.0
        %856 = vmatpush1.msra.mxu0 0.0
        %857 = vmatprep.subr.mxu0 0.0
        %858 = vmatpush1.msra.mxu0 0.0
        %859 = vmatprep.subr.mxu0 0.0
        %860 = vmatpush1.msra.mxu0 0.0
        %861 = vmatprep.subr.mxu0 0.0
        %862 = vmatpush1.msra.mxu0 0.0
        %863 = vmatprep.subr.mxu0 0.0
        %864 = vmatpush1.msra.mxu0 0.0
        %865 = vmatprep.subr.mxu0 0.0
        %866 = vmatpush1.msra.mxu0 0.0
        %867 = vmatprep.subr.mxu0 0.0
        %868 = vmatpush1.msra.mxu0 0.0
        %869 = vmatprep.subr.mxu0 0.0
        %870 = vmatpush1.msra.mxu0 0.0
        %871 = vmatprep.subr.mxu0 0.0
        %872 = vmatpush1.msra.mxu0 0.0
        %873 = vmatprep.subr.mxu0 0.0
        %874 = vmatpush1.msra.mxu0 0.0
        %875 = vmatprep.subr.mxu0 0.0
        %876 = vmatpush1.msra.mxu0 0.0
        %877 = vmatprep.subr.mxu0 0.0
        %878 = vmatpush1.msra.mxu0 0.0
        %879 = vmatprep.subr.mxu0 0.0
        %880 = vmatpush1.msra.mxu0 0.0
        %881 = vmatprep.subr.mxu0 0.0
        %882 = vmatpush1.msra.mxu0 0.0
        %883 = vmatprep.subr.mxu0 0.0
        %884 = vmatpush1.msra.mxu0 0.0
        %885 = vmatprep.subr.mxu0 0.0
        %886 = vmatpush1.msra.mxu0 0.0
        %887 = vmatprep.subr.mxu0 0.0
        %888 = vmatpush1.msra.mxu0 0.0
        %889 = vmatprep.subr.mxu0 0.0
        %890 = vmatpush1.msra.mxu0 0.0
        %891 = vmatprep.subr.mxu0 0.0
        %892 = vmatpush1.msra.mxu0 0.0
        %893 = vmatprep.subr.mxu0 0.0
        %894 = vmatpush1.msra.mxu0 0.0
        %895 = vmatprep.subr.mxu0 0.0
        %896 = vmatpush1.msra.mxu0 0.0
        %897 = vmatprep.subr.mxu0 0.0
        %898 = vmatpush1.msra.mxu0 0.0
        %899 = vmatprep.mubr.f32.mxu0 0.0
        %900 = vmatmul.mubr.f32.gmra.mrb[0].mxu0 %v530
        %v901 = vpop.f32.mrb[0].mxu0
        %v902 = vadd.f32 %v520, %v901
        %v903 = vpop.f32.mrb[0].mxu0
        %904 = vmatprep.mubr.f32.mxu0 0.0
        %905 = vmatmul.mubr.f32.gmra.mrb[0].mxu0 %v533
        %v906 = vpop.f32.mrb[0].mxu0
        %v907 = vadd.f32 %v525, %v906
        %v908 = vpop.f32.mrb[0].mxu0
        %909 = vdwg.mxu0
        %910 = vmatprep.subr.mxu0 0.0
        %911 = vmatpush1.msra.mxu0 %v418
        %912 = vmatprep.subr.mxu0 0.0
        %913 = vmatpush1.msra.mxu0 %v427
        %914 = vmatprep.subr.mxu0 0.0
        %915 = vmatpush1.msra.mxu0 0.0
        %916 = vmatprep.subr.mxu0 0.0
        %917 = vmatpush1.msra.mxu0 0.0
        %918 = vmatprep.subr.mxu0 0.0
        %919 = vmatpush1.msra.mxu0 0.0
        %920 = vmatprep.subr.mxu0 0.0
        %921 = vmatpush1.msra.mxu0 0.0
        %922 = vmatprep.subr.mxu0 0.0
        %923 = vmatpush1.msra.mxu0 0.0
        %924 = vmatprep.subr.mxu0 0.0
        %925 = vmatpush1.msra.mxu0 0.0
        %926 = vmatprep.subr.mxu0 0.0
        %927 = vmatpush1.msra.mxu0 0.0
        %928 = vmatprep.subr.mxu0 0.0
        %929 = vmatpush1.msra.mxu0 0.0
        %930 = vmatprep.subr.mxu0 0.0
        %931 = vmatpush1.msra.mxu0 0.0
        %932 = vmatprep.subr.mxu0 0.0
        %933 = vmatpush1.msra.mxu0 0.0
        %934 = vmatprep.subr.mxu0 0.0
        %935 = vmatpush1.msra.mxu0 0.0
        %936 = vmatprep.subr.mxu0 0.0
        %937 = vmatpush1.msra.mxu0 0.0
        %938 = vmatprep.subr.mxu0 0.0
        %939 = vmatpush1.msra.mxu0 0.0
        %940 = vmatprep.subr.mxu0 0.0
        %941 = vmatpush1.msra.mxu0 0.0
        %942 = vmatprep.subr.mxu0 0.0
        %943 = vmatpush1.msra.mxu0 0.0
        %944 = vmatprep.subr.mxu0 0.0
        %945 = vmatpush1.msra.mxu0 0.0
        %946 = vmatprep.subr.mxu0 0.0
        %947 = vmatpush1.msra.mxu0 0.0
        %948 = vmatprep.subr.mxu0 0.0
        %949 = vmatpush1.msra.mxu0 0.0
        %950 = vmatprep.subr.mxu0 0.0
        %951 = vmatpush1.msra.mxu0 0.0
        %952 = vmatprep.subr.mxu0 0.0
        %953 = vmatpush1.msra.mxu0 0.0
        %954 = vmatprep.subr.mxu0 0.0
        %955 = vmatpush1.msra.mxu0 0.0
        %956 = vmatprep.subr.mxu0 0.0
        %957 = vmatpush1.msra.mxu0 0.0
        %958 = vmatprep.subr.mxu0 0.0
        %959 = vmatpush1.msra.mxu0 0.0
        %960 = vmatprep.subr.mxu0 0.0
        %961 = vmatpush1.msra.mxu0 0.0
        %962 = vmatprep.subr.mxu0 0.0
        %963 = vmatpush1.msra.mxu0 0.0
        %964 = vmatprep.subr.mxu0 0.0
        %965 = vmatpush1.msra.mxu0 0.0
        %966 = vmatprep.subr.mxu0 0.0
        %967 = vmatpush1.msra.mxu0 0.0
        %968 = vmatprep.subr.mxu0 0.0
        %969 = vmatpush1.msra.mxu0 0.0
        %970 = vmatprep.subr.mxu0 0.0
        %971 = vmatpush1.msra.mxu0 0.0
        %972 = vmatprep.subr.mxu0 0.0
        %973 = vmatpush1.msra.mxu0 0.0
        %974 = vmatprep.mubr.f32.mxu0 0.0
        %975 = vmatmul.mubr.f32.gmra.mrb[0].mxu0 %v530
        %v976 = vpop.f32.mrb[0].mxu0
        %v977 = vadd.f32 %v520, %v976
        %v978 = vpop.f32.mrb[0].mxu0
        %979 = vmatprep.mubr.f32.mxu0 0.0
        %980 = vmatmul.mubr.f32.gmra.mrb[0].mxu0 %v533
        %v981 = vpop.f32.mrb[0].mxu0
        %v982 = vadd.f32 %v525, %v981
        %v983 = vpop.f32.mrb[0].mxu0
        %984 = vdwg.mxu0
        %985 = vmatprep.subr.mxu0 0.0
        %986 = vmatpush1.msra.mxu0 %v419
        %987 = vmatprep.subr.mxu0 0.0
        %988 = vmatpush1.msra.mxu0 %v428
        %989 = vmatprep.subr.mxu0 0.0
        %990 = vmatpush1.msra.mxu0 0.0
        %991 = vmatprep.subr.mxu0 0.0
        %992 = vmatpush1.msra.mxu0 0.0
        %993 = vmatprep.subr.mxu0 0.0
        %994 = vmatpush1.msra.mxu0 0.0
        %995 = vmatprep.subr.mxu0 0.0
        %996 = vmatpush1.msra.mxu0 0.0
        %997 = vmatprep.subr.mxu0 0.0
        %998 = vmatpush1.msra.mxu0 0.0
        %999 = vmatprep.subr.mxu0 0.0
        %1000 = vmatpush1.msra.mxu0 0.0
        %1001 = vmatprep.subr.mxu0 0.0
        %1002 = vmatpush1.msra.mxu0 0.0
        %1003 = vmatprep.subr.mxu0 0.0
        %1004 = vmatpush1.msra.mxu0 0.0
        %1005 = vmatprep.subr.mxu0 0.0
        %1006 = vmatpush1.msra.mxu0 0.0
        %1007 = vmatprep.subr.mxu0 0.0
        %1008 = vmatpush1.msra.mxu0 0.0
        %1009 = vmatprep.subr.mxu0 0.0
        %1010 = vmatpush1.msra.mxu0 0.0
        %1011 = vmatprep.subr.mxu0 0.0
        %1012 = vmatpush1.msra.mxu0 0.0
        %1013 = vmatprep.subr.mxu0 0.0
        %1014 = vmatpush1.msra.mxu0 0.0
        %1015 = vmatprep.subr.mxu0 0.0
        %1016 = vmatpush1.msra.mxu0 0.0
        %1017 = vmatprep.subr.mxu0 0.0
        %1018 = vmatpush1.msra.mxu0 0.0
        %1019 = vmatprep.subr.mxu0 0.0
        %1020 = vmatpush1.msra.mxu0 0.0
        %1021 = vmatprep.subr.mxu0 0.0
        %1022 = vmatpush1.msra.mxu0 0.0
        %1023 = vmatprep.subr.mxu0 0.0
        %1024 = vmatpush1.msra.mxu0 0.0
        %1025 = vmatprep.subr.mxu0 0.0
        %1026 = vmatpush1.msra.mxu0 0.0
        %1027 = vmatprep.subr.mxu0 0.0
        %1028 = vmatpush1.msra.mxu0 0.0
        %1029 = vmatprep.subr.mxu0 0.0
        %1030 = vmatpush1.msra.mxu0 0.0
        %1031 = vmatprep.subr.mxu0 0.0
        %1032 = vmatpush1.msra.mxu0 0.0
        %1033 = vmatprep.subr.mxu0 0.0
        %1034 = vmatpush1.msra.mxu0 0.0
        %1035 = vmatprep.subr.mxu0 0.0
        %1036 = vmatpush1.msra.mxu0 0.0
        %1037 = vmatprep.subr.mxu0 0.0
        %1038 = vmatpush1.msra.mxu0 0.0
        %1039 = vmatprep.subr.mxu0 0.0
        %1040 = vmatpush1.msra.mxu0 0.0
        %1041 = vmatprep.subr.mxu0 0.0
        %1042 = vmatpush1.msra.mxu0 0.0
        %1043 = vmatprep.subr.mxu0 0.0
        %1044 = vmatpush1.msra.mxu0 0.0
        %1045 = vmatprep.subr.mxu0 0.0
        %1046 = vmatpush1.msra.mxu0 0.0
        %1047 = vmatprep.subr.mxu0 0.0
        %1048 = vmatpush1.msra.mxu0 0.0
        %1049 = vmatprep.mubr.f32.mxu0 0.0
        %1050 = vmatmul.mubr.f32.gmra.mrb[0].mxu0 %v530
        %v1051 = vpop.f32.mrb[0].mxu0
        %v1052 = vadd.f32 %v520, %v1051
        %v1053 = vpop.f32.mrb[0].mxu0
        %1054 = vmatprep.mubr.f32.mxu0 0.0
        %1055 = vmatmul.mubr.f32.gmra.mrb[0].mxu0 %v533
        %v1056 = vpop.f32.mrb[0].mxu0
        %v1057 = vadd.f32 %v525, %v1056
        %v1058 = vpop.f32.mrb[0].mxu0
        %1059 = vdwg.mxu0
        %1060 = vmatprep.subr.mxu0 0.0
        %1061 = vmatpush1.msra.mxu0 %v420
        %1062 = vmatprep.subr.mxu0 0.0
        %1063 = vmatpush1.msra.mxu0 %v429
        %1064 = vmatprep.subr.mxu0 0.0
        %1065 = vmatpush1.msra.mxu0 0.0
        %1066 = vmatprep.subr.mxu0 0.0
        %1067 = vmatpush1.msra.mxu0 0.0
        %1068 = vmatprep.subr.mxu0 0.0
        %1069 = vmatpush1.msra.mxu0 0.0
        %1070 = vmatprep.subr.mxu0 0.0
        %1071 = vmatpush1.msra.mxu0 0.0
        %1072 = vmatprep.subr.mxu0 0.0
        %1073 = vmatpush1.msra.mxu0 0.0
        %1074 = vmatprep.subr.mxu0 0.0
        %1075 = vmatpush1.msra.mxu0 0.0
        %1076 = vmatprep.subr.mxu0 0.0
        %1077 = vmatpush1.msra.mxu0 0.0
        %1078 = vmatprep.subr.mxu0 0.0
        %1079 = vmatpush1.msra.mxu0 0.0
        %1080 = vmatprep.subr.mxu0 0.0
        %1081 = vmatpush1.msra.mxu0 0.0
        %1082 = vmatprep.subr.mxu0 0.0
        %1083 = vmatpush1.msra.mxu0 0.0
        %1084 = vmatprep.subr.mxu0 0.0
        %1085 = vmatpush1.msra.mxu0 0.0
        %1086 = vmatprep.subr.mxu0 0.0
        %1087 = vmatpush1.msra.mxu0 0.0
        %1088 = vmatprep.subr.mxu0 0.0
        %1089 = vmatpush1.msra.mxu0 0.0
        %1090 = vmatprep.subr.mxu0 0.0
        %1091 = vmatpush1.msra.mxu0 0.0
        %1092 = vmatprep.subr.mxu0 0.0
        %1093 = vmatpush1.msra.mxu0 0.0
        %1094 = vmatprep.subr.mxu0 0.0
        %1095 = vmatpush1.msra.mxu0 0.0
        %1096 = vmatprep.subr.mxu0 0.0
        %1097 = vmatpush1.msra.mxu0 0.0
        %1098 = vmatprep.subr.mxu0 0.0
        %1099 = vmatpush1.msra.mxu0 0.0
        %1100 = vmatprep.subr.mxu0 0.0
        %1101 = vmatpush1.msra.mxu0 0.0
        %1102 = vmatprep.subr.mxu0 0.0
        %1103 = vmatpush1.msra.mxu0 0.0
        %1104 = vmatprep.subr.mxu0 0.0
        %1105 = vmatpush1.msra.mxu0 0.0
        %1106 = vmatprep.subr.mxu0 0.0
        %1107 = vmatpush1.msra.mxu0 0.0
        %1108 = vmatprep.subr.mxu0 0.0
        %1109 = vmatpush1.msra.mxu0 0.0
        %1110 = vmatprep.subr.mxu0 0.0
        %1111 = vmatpush1.msra.mxu0 0.0
        %1112 = vmatprep.subr.mxu0 0.0
        %1113 = vmatpush1.msra.mxu0 0.0
        %1114 = vmatprep.subr.mxu0 0.0
        %1115 = vmatpush1.msra.mxu0 0.0
        %1116 = vmatprep.subr.mxu0 0.0
        %1117 = vmatpush1.msra.mxu0 0.0
        %1118 = vmatprep.subr.mxu0 0.0
        %1119 = vmatpush1.msra.mxu0 0.0
        %1120 = vmatprep.subr.mxu0 0.0
        %1121 = vmatpush1.msra.mxu0 0.0
        %1122 = vmatprep.subr.mxu0 0.0
        %1123 = vmatpush1.msra.mxu0 0.0
        %1124 = vmatprep.mubr.f32.mxu0 0.0
        %1125 = vmatmul.mubr.f32.gmra.mrb[0].mxu0 %v530
        %v1126 = vpop.f32.mrb[0].mxu0
        %v1127 = vadd.f32 %v520, %v1126
        %v1128 = vpop.f32.mrb[0].mxu0
        %1129 = vmatprep.mubr.f32.mxu0 0.0
        %1130 = vmatmul.mubr.f32.gmra.mrb[0].mxu0 %v533
        %v1131 = vpop.f32.mrb[0].mxu0
        %v1132 = vadd.f32 %v525, %v1131
        %v1133 = vpop.f32.mrb[0].mxu0
        %1134 = vdwg.mxu0
        %v1135 = vxor.u32 %v602, 2147483648
        %v1136 = vxor.u32 %v607, 2147483648
        %v1137 = vxor.u32 %v677, 2147483648
        %v1138 = vxor.u32 %v682, 2147483648
        %v1139 = vxor.u32 %v752, 2147483648
        %v1140 = vxor.u32 %v757, 2147483648
        %v1141 = vxor.u32 %v827, 2147483648
        %v1142 = vxor.u32 %v832, 2147483648
        %v1143 = vxor.u32 %v902, 2147483648
        %v1144 = vxor.u32 %v907, 2147483648
        %v1145 = vxor.u32 %v977, 2147483648
        %v1146 = vxor.u32 %v982, 2147483648
        %v1147 = vxor.u32 %v1052, 2147483648
        %v1148 = vxor.u32 %v1057, 2147483648
        %v1149 = vxor.u32 %v1127, 2147483648
        %v1150 = vxor.u32 %v1132, 2147483648
        %v1151 = vmul.f32 %v1135, 1.442695
        %v1152 = vpow.pop %v1151
        %v1153 = vmul.f32 %v1136, 1.442695
        %v1154 = vpow.pop %v1153
        %v1155 = vmul.f32 %v1137, 1.442695
        %v1156 = vpow.pop %v1155
        %v1157 = vmul.f32 %v1138, 1.442695
        %v1158 = vpow.pop %v1157
        %v1159 = vmul.f32 %v1139, 1.442695
        %v1160 = vpow.pop %v1159
        %v1161 = vmul.f32 %v1140, 1.442695
        %v1162 = vpow.pop %v1161
        %v1163 = vmul.f32 %v1141, 1.442695
        %v1164 = vpow.pop %v1163
        %v1165 = vmul.f32 %v1142, 1.442695
        %v1166 = vpow.pop %v1165
        %v1167 = vmul.f32 %v1143, 1.442695
        %v1168 = vpow.pop %v1167
        %v1169 = vmul.f32 %v1144, 1.442695
        %v1170 = vpow.pop %v1169
        %v1171 = vmul.f32 %v1145, 1.442695
        %v1172 = vpow.pop %v1171
        %v1173 = vmul.f32 %v1146, 1.442695
        %v1174 = vpow.pop %v1173
        %v1175 = vmul.f32 %v1147, 1.442695
        %v1176 = vpow.pop %v1175
        %v1177 = vmul.f32 %v1148, 1.442695
        %v1178 = vpow.pop %v1177
        %v1179 = vmul.f32 %v1149, 1.442695
        %v1180 = vpow.pop %v1179
        %v1181 = vmul.f32 %v1150, 1.442695
        %v1182 = vpow.pop %v1181
        %v1183 = vadd.f32 %v1152, 1.0
        %v1184 = vadd.f32 %v1154, 1.0
        %v1185 = vadd.f32 %v1156, 1.0
        %v1186 = vadd.f32 %v1158, 1.0
        %v1187 = vadd.f32 %v1160, 1.0
        %v1188 = vadd.f32 %v1162, 1.0
        %v1189 = vadd.f32 %v1164, 1.0
        %v1190 = vadd.f32 %v1166, 1.0
        %v1191 = vadd.f32 %v1168, 1.0
        %v1192 = vadd.f32 %v1170, 1.0
        %v1193 = vadd.f32 %v1172, 1.0
        %v1194 = vadd.f32 %v1174, 1.0
        %v1195 = vadd.f32 %v1176, 1.0
        %v1196 = vadd.f32 %v1178, 1.0
        %v1197 = vadd.f32 %v1180, 1.0
        %v1198 = vadd.f32 %v1182, 1.0
        %v1199 = vrcp.pop %v1183
        %v1200 = vmul.f32 1.0, %v1199
        %v1201 = vrcp.pop %v1184
        %v1202 = vmul.f32 1.0, %v1201
        %v1203 = vrcp.pop %v1185
        %v1204 = vmul.f32 1.0, %v1203
        %v1205 = vrcp.pop %v1186
        %v1206 = vmul.f32 1.0, %v1205
        %v1207 = vrcp.pop %v1187
        %v1208 = vmul.f32 1.0, %v1207
        %v1209 = vrcp.pop %v1188
        %v1210 = vmul.f32 1.0, %v1209
        %v1211 = vrcp.pop %v1189
        %v1212 = vmul.f32 1.0, %v1211
        %v1213 = vrcp.pop %v1190
        %v1214 = vmul.f32 1.0, %v1213
        %v1215 = vrcp.pop %v1191
        %v1216 = vmul.f32 1.0, %v1215
        %v1217 = vrcp.pop %v1192
        %v1218 = vmul.f32 1.0, %v1217
        %v1219 = vrcp.pop %v1193
        %v1220 = vmul.f32 1.0, %v1219
        %v1221 = vrcp.pop %v1194
        %v1222 = vmul.f32 1.0, %v1221
        %v1223 = vrcp.pop %v1195
        %v1224 = vmul.f32 1.0, %v1223
        %v1225 = vrcp.pop %v1196
        %v1226 = vmul.f32 1.0, %v1225
        %v1227 = vrcp.pop %v1197
        %v1228 = vmul.f32 1.0, %v1227
        %v1229 = vrcp.pop %v1198
        %v1230 = vmul.f32 1.0, %v1229
        %v1231 = vld [vmem:[%s6] sm:$0xff]
        %v1232 = vld [vmem:[%s7] sm:$0xff]
        %1234 = vset.pattern.permute.xlu0 0
        %1235 = vperm.xlu0 %1234, %v1232
        %v1236 = vpop.permute.xlu0 %1235
        %v1239 = vsel %vm528, %v1231, 0
        %1241 = vmatprep.subr.mxu0 0.0
        %1242 = vmatpush1.msra.mxu0 %v1200
        %1243 = vmatprep.subr.mxu0 0.0
        %1244 = vmatpush1.msra.mxu0 %v1202
        %1245 = vmatprep.subr.mxu0 0.0
        %1246 = vmatpush1.msra.mxu0 0.0
        %1247 = vmatprep.subr.mxu0 0.0
        %1248 = vmatpush1.msra.mxu0 0.0
        %1249 = vmatprep.subr.mxu0 0.0
        %1250 = vmatpush1.msra.mxu0 0.0
        %1251 = vmatprep.subr.mxu0 0.0
        %1252 = vmatpush1.msra.mxu0 0.0
        %1253 = vmatprep.subr.mxu0 0.0
        %1254 = vmatpush1.msra.mxu0 0.0
        %1255 = vmatprep.subr.mxu0 0.0
        %1256 = vmatpush1.msra.mxu0 0.0
        %1257 = vmatprep.subr.mxu0 0.0
        %1258 = vmatpush1.msra.mxu0 0.0
        %1259 = vmatprep.subr.mxu0 0.0
        %1260 = vmatpush1.msra.mxu0 0.0
        %1261 = vmatprep.subr.mxu0 0.0
        %1262 = vmatpush1.msra.mxu0 0.0
        %1263 = vmatprep.subr.mxu0 0.0
        %1264 = vmatpush1.msra.mxu0 0.0
        %1265 = vmatprep.subr.mxu0 0.0
        %1266 = vmatpush1.msra.mxu0 0.0
        %1267 = vmatprep.subr.mxu0 0.0
        %1268 = vmatpush1.msra.mxu0 0.0
        %1269 = vmatprep.subr.mxu0 0.0
        %1270 = vmatpush1.msra.mxu0 0.0
        %1271 = vmatprep.subr.mxu0 0.0
        %1272 = vmatpush1.msra.mxu0 0.0
        %1273 = vmatprep.subr.mxu0 0.0
        %1274 = vmatpush1.msra.mxu0 0.0
        %1275 = vmatprep.subr.mxu0 0.0
        %1276 = vmatpush1.msra.mxu0 0.0
        %1277 = vmatprep.subr.mxu0 0.0
        %1278 = vmatpush1.msra.mxu0 0.0
        %1279 = vmatprep.subr.mxu0 0.0
        %1280 = vmatpush1.msra.mxu0 0.0
        %1281 = vmatprep.subr.mxu0 0.0
        %1282 = vmatpush1.msra.mxu0 0.0
        %1283 = vmatprep.subr.mxu0 0.0
        %1284 = vmatpush1.msra.mxu0 0.0
        %1285 = vmatprep.subr.mxu0 0.0
        %1286 = vmatpush1.msra.mxu0 0.0
        %1287 = vmatprep.subr.mxu0 0.0
        %1288 = vmatpush1.msra.mxu0 0.0
        %1289 = vmatprep.subr.mxu0 0.0
        %1290 = vmatpush1.msra.mxu0 0.0
        %1291 = vmatprep.subr.mxu0 0.0
        %1292 = vmatpush1.msra.mxu0 0.0
        %1293 = vmatprep.subr.mxu0 0.0
        %1294 = vmatpush1.msra.mxu0 0.0
        %1295 = vmatprep.subr.mxu0 0.0
        %1296 = vmatpush1.msra.mxu0 0.0
        %1297 = vmatprep.subr.mxu0 0.0
        %1298 = vmatpush1.msra.mxu0 0.0
        %1299 = vmatprep.subr.mxu0 0.0
        %1300 = vmatpush1.msra.mxu0 0.0
        %1301 = vmatprep.subr.mxu0 0.0
        %1302 = vmatpush1.msra.mxu0 0.0
        %1303 = vmatprep.subr.mxu0 0.0
        %1304 = vmatpush1.msra.mxu0 0.0
        %1305 = vmatprep.mubr.f32.mxu0 0.0
        %1306 = vmatmul.mubr.f32.gmra.mrb[0].mxu0 %v1239
        %v1307 = vpop.f32.mrb[0].mxu0
        %v1308 = vadd.f32 %v1236, %v1307
        %v1309 = vpop.f32.mrb[0].mxu0
        %1310 = vdwg.mxu0
        %1311 = vmatprep.subr.mxu0 0.0
        %1312 = vmatpush1.msra.mxu0 %v1204
        %1313 = vmatprep.subr.mxu0 0.0
        %1314 = vmatpush1.msra.mxu0 %v1206
        %1315 = vmatprep.subr.mxu0 0.0
        %1316 = vmatpush1.msra.mxu0 0.0
        %1317 = vmatprep.subr.mxu0 0.0
        %1318 = vmatpush1.msra.mxu0 0.0
        %1319 = vmatprep.subr.mxu0 0.0
        %1320 = vmatpush1.msra.mxu0 0.0
        %1321 = vmatprep.subr.mxu0 0.0
        %1322 = vmatpush1.msra.mxu0 0.0
        %1323 = vmatprep.subr.mxu0 0.0
        %1324 = vmatpush1.msra.mxu0 0.0
        %1325 = vmatprep.subr.mxu0 0.0
        %1326 = vmatpush1.msra.mxu0 0.0
        %1327 = vmatprep.subr.mxu0 0.0
        %1328 = vmatpush1.msra.mxu0 0.0
        %1329 = vmatprep.subr.mxu0 0.0
        %1330 = vmatpush1.msra.mxu0 0.0
        %1331 = vmatprep.subr.mxu0 0.0
        %1332 = vmatpush1.msra.mxu0 0.0
        %1333 = vmatprep.subr.mxu0 0.0
        %1334 = vmatpush1.msra.mxu0 0.0
        %1335 = vmatprep.subr.mxu0 0.0
        %1336 = vmatpush1.msra.mxu0 0.0
        %1337 = vmatprep.subr.mxu0 0.0
        %1338 = vmatpush1.msra.mxu0 0.0
        %1339 = vmatprep.subr.mxu0 0.0
        %1340 = vmatpush1.msra.mxu0 0.0
        %1341 = vmatprep.subr.mxu0 0.0
        %1342 = vmatpush1.msra.mxu0 0.0
        %1343 = vmatprep.subr.mxu0 0.0
        %1344 = vmatpush1.msra.mxu0 0.0
        %1345 = vmatprep.subr.mxu0 0.0
        %1346 = vmatpush1.msra.mxu0 0.0
        %1347 = vmatprep.subr.mxu0 0.0
        %1348 = vmatpush1.msra.mxu0 0.0
        %1349 = vmatprep.subr.mxu0 0.0
        %1350 = vmatpush1.msra.mxu0 0.0
        %1351 = vmatprep.subr.mxu0 0.0
        %1352 = vmatpush1.msra.mxu0 0.0
        %1353 = vmatprep.subr.mxu0 0.0
        %1354 = vmatpush1.msra.mxu0 0.0
        %1355 = vmatprep.subr.mxu0 0.0
        %1356 = vmatpush1.msra.mxu0 0.0
        %1357 = vmatprep.subr.mxu0 0.0
        %1358 = vmatpush1.msra.mxu0 0.0
        %1359 = vmatprep.subr.mxu0 0.0
        %1360 = vmatpush1.msra.mxu0 0.0
        %1361 = vmatprep.subr.mxu0 0.0
        %1362 = vmatpush1.msra.mxu0 0.0
        %1363 = vmatprep.subr.mxu0 0.0
        %1364 = vmatpush1.msra.mxu0 0.0
        %1365 = vmatprep.subr.mxu0 0.0
        %1366 = vmatpush1.msra.mxu0 0.0
        %1367 = vmatprep.subr.mxu0 0.0
        %1368 = vmatpush1.msra.mxu0 0.0
        %1369 = vmatprep.subr.mxu0 0.0
        %1370 = vmatpush1.msra.mxu0 0.0
        %1371 = vmatprep.subr.mxu0 0.0
        %1372 = vmatpush1.msra.mxu0 0.0
        %1373 = vmatprep.subr.mxu0 0.0
        %1374 = vmatpush1.msra.mxu0 0.0
        %1375 = vmatprep.mubr.f32.mxu0 0.0
        %1376 = vmatmul.mubr.f32.gmra.mrb[0].mxu0 %v1239
        %v1377 = vpop.f32.mrb[0].mxu0
        %v1378 = vadd.f32 %v1236, %v1377
        %v1379 = vpop.f32.mrb[0].mxu0
        %1380 = vdwg.mxu0
        %1381 = vmatprep.subr.mxu0 0.0
        %1382 = vmatpush1.msra.mxu0 %v1208
        %1383 = vmatprep.subr.mxu0 0.0
        %1384 = vmatpush1.msra.mxu0 %v1210
        %1385 = vmatprep.subr.mxu0 0.0
        %1386 = vmatpush1.msra.mxu0 0.0
        %1387 = vmatprep.subr.mxu0 0.0
        %1388 = vmatpush1.msra.mxu0 0.0
        %1389 = vmatprep.subr.mxu0 0.0
        %1390 = vmatpush1.msra.mxu0 0.0
        %1391 = vmatprep.subr.mxu0 0.0
        %1392 = vmatpush1.msra.mxu0 0.0
        %1393 = vmatprep.subr.mxu0 0.0
        %1394 = vmatpush1.msra.mxu0 0.0
        %1395 = vmatprep.subr.mxu0 0.0
        %1396 = vmatpush1.msra.mxu0 0.0
        %1397 = vmatprep.subr.mxu0 0.0
        %1398 = vmatpush1.msra.mxu0 0.0
        %1399 = vmatprep.subr.mxu0 0.0
        %1400 = vmatpush1.msra.mxu0 0.0
        %1401 = vmatprep.subr.mxu0 0.0
        %1402 = vmatpush1.msra.mxu0 0.0
        %1403 = vmatprep.subr.mxu0 0.0
        %1404 = vmatpush1.msra.mxu0 0.0
        %1405 = vmatprep.subr.mxu0 0.0
        %1406 = vmatpush1.msra.mxu0 0.0
        %1407 = vmatprep.subr.mxu0 0.0
        %1408 = vmatpush1.msra.mxu0 0.0
        %1409 = vmatprep.subr.mxu0 0.0
        %1410 = vmatpush1.msra.mxu0 0.0
        %1411 = vmatprep.subr.mxu0 0.0
        %1412 = vmatpush1.msra.mxu0 0.0
        %1413 = vmatprep.subr.mxu0 0.0
        %1414 = vmatpush1.msra.mxu0 0.0
        %1415 = vmatprep.subr.mxu0 0.0
        %1416 = vmatpush1.msra.mxu0 0.0
        %1417 = vmatprep.subr.mxu0 0.0
        %1418 = vmatpush1.msra.mxu0 0.0
        %1419 = vmatprep.subr.mxu0 0.0
        %1420 = vmatpush1.msra.mxu0 0.0
        %1421 = vmatprep.subr.mxu0 0.0
        %1422 = vmatpush1.msra.mxu0 0.0
        %1423 = vmatprep.subr.mxu0 0.0
        %1424 = vmatpush1.msra.mxu0 0.0
        %1425 = vmatprep.subr.mxu0 0.0
        %1426 = vmatpush1.msra.mxu0 0.0
        %1427 = vmatprep.subr.mxu0 0.0
        %1428 = vmatpush1.msra.mxu0 0.0
        %1429 = vmatprep.subr.mxu0 0.0
        %1430 = vmatpush1.msra.mxu0 0.0
        %1431 = vmatprep.subr.mxu0 0.0
        %1432 = vmatpush1.msra.mxu0 0.0
        %1433 = vmatprep.subr.mxu0 0.0
        %1434 = vmatpush1.msra.mxu0 0.0
        %1435 = vmatprep.subr.mxu0 0.0
        %1436 = vmatpush1.msra.mxu0 0.0
        %1437 = vmatprep.subr.mxu0 0.0
        %1438 = vmatpush1.msra.mxu0 0.0
        %1439 = vmatprep.subr.mxu0 0.0
        %1440 = vmatpush1.msra.mxu0 0.0
        %1441 = vmatprep.subr.mxu0 0.0
        %1442 = vmatpush1.msra.mxu0 0.0
        %1443 = vmatprep.subr.mxu0 0.0
        %1444 = vmatpush1.msra.mxu0 0.0
        %1445 = vmatprep.mubr.f32.mxu0 0.0
        %1446 = vmatmul.mubr.f32.gmra.mrb[0].mxu0 %v1239
        %v1447 = vpop.f32.mrb[0].mxu0
        %v1448 = vadd.f32 %v1236, %v1447
        %v1449 = vpop.f32.mrb[0].mxu0
        %1450 = vdwg.mxu0
        %1451 = vmatprep.subr.mxu0 0.0
        %1452 = vmatpush1.msra.mxu0 %v1212
        %1453 = vmatprep.subr.mxu0 0.0
        %1454 = vmatpush1.msra.mxu0 %v1214
        %1455 = vmatprep.subr.mxu0 0.0
        %1456 = vmatpush1.msra.mxu0 0.0
        %1457 = vmatprep.subr.mxu0 0.0
        %1458 = vmatpush1.msra.mxu0 0.0
        %1459 = vmatprep.subr.mxu0 0.0
        %1460 = vmatpush1.msra.mxu0 0.0
        %1461 = vmatprep.subr.mxu0 0.0
        %1462 = vmatpush1.msra.mxu0 0.0
        %1463 = vmatprep.subr.mxu0 0.0
        %1464 = vmatpush1.msra.mxu0 0.0
        %1465 = vmatprep.subr.mxu0 0.0
        %1466 = vmatpush1.msra.mxu0 0.0
        %1467 = vmatprep.subr.mxu0 0.0
        %1468 = vmatpush1.msra.mxu0 0.0
        %1469 = vmatprep.subr.mxu0 0.0
        %1470 = vmatpush1.msra.mxu0 0.0
        %1471 = vmatprep.subr.mxu0 0.0
        %1472 = vmatpush1.msra.mxu0 0.0
        %1473 = vmatprep.subr.mxu0 0.0
        %1474 = vmatpush1.msra.mxu0 0.0
        %1475 = vmatprep.subr.mxu0 0.0
        %1476 = vmatpush1.msra.mxu0 0.0
        %1477 = vmatprep.subr.mxu0 0.0
        %1478 = vmatpush1.msra.mxu0 0.0
        %1479 = vmatprep.subr.mxu0 0.0
        %1480 = vmatpush1.msra.mxu0 0.0
        %1481 = vmatprep.subr.mxu0 0.0
        %1482 = vmatpush1.msra.mxu0 0.0
        %1483 = vmatprep.subr.mxu0 0.0
        %1484 = vmatpush1.msra.mxu0 0.0
        %1485 = vmatprep.subr.mxu0 0.0
        %1486 = vmatpush1.msra.mxu0 0.0
        %1487 = vmatprep.subr.mxu0 0.0
        %1488 = vmatpush1.msra.mxu0 0.0
        %1489 = vmatprep.subr.mxu0 0.0
        %1490 = vmatpush1.msra.mxu0 0.0
        %1491 = vmatprep.subr.mxu0 0.0
        %1492 = vmatpush1.msra.mxu0 0.0
        %1493 = vmatprep.subr.mxu0 0.0
        %1494 = vmatpush1.msra.mxu0 0.0
        %1495 = vmatprep.subr.mxu0 0.0
        %1496 = vmatpush1.msra.mxu0 0.0
        %1497 = vmatprep.subr.mxu0 0.0
        %1498 = vmatpush1.msra.mxu0 0.0
        %1499 = vmatprep.subr.mxu0 0.0
        %1500 = vmatpush1.msra.mxu0 0.0
        %1501 = vmatprep.subr.mxu0 0.0
        %1502 = vmatpush1.msra.mxu0 0.0
        %1503 = vmatprep.subr.mxu0 0.0
        %1504 = vmatpush1.msra.mxu0 0.0
        %1505 = vmatprep.subr.mxu0 0.0
        %1506 = vmatpush1.msra.mxu0 0.0
        %1507 = vmatprep.subr.mxu0 0.0
        %1508 = vmatpush1.msra.mxu0 0.0
        %1509 = vmatprep.subr.mxu0 0.0
        %1510 = vmatpush1.msra.mxu0 0.0
        %1511 = vmatprep.subr.mxu0 0.0
        %1512 = vmatpush1.msra.mxu0 0.0
        %1513 = vmatprep.subr.mxu0 0.0
        %1514 = vmatpush1.msra.mxu0 0.0
        %1515 = vmatprep.mubr.f32.mxu0 0.0
        %1516 = vmatmul.mubr.f32.gmra.mrb[0].mxu0 %v1239
        %v1517 = vpop.f32.mrb[0].mxu0
        %v1518 = vadd.f32 %v1236, %v1517
        %v1519 = vpop.f32.mrb[0].mxu0
        %1520 = vdwg.mxu0
        %1521 = vmatprep.subr.mxu0 0.0
        %1522 = vmatpush1.msra.mxu0 %v1216
        %1523 = vmatprep.subr.mxu0 0.0
        %1524 = vmatpush1.msra.mxu0 %v1218
        %1525 = vmatprep.subr.mxu0 0.0
        %1526 = vmatpush1.msra.mxu0 0.0
        %1527 = vmatprep.subr.mxu0 0.0
        %1528 = vmatpush1.msra.mxu0 0.0
        %1529 = vmatprep.subr.mxu0 0.0
        %1530 = vmatpush1.msra.mxu0 0.0
        %1531 = vmatprep.subr.mxu0 0.0
        %1532 = vmatpush1.msra.mxu0 0.0
        %1533 = vmatprep.subr.mxu0 0.0
        %1534 = vmatpush1.msra.mxu0 0.0
        %1535 = vmatprep.subr.mxu0 0.0
        %1536 = vmatpush1.msra.mxu0 0.0
        %1537 = vmatprep.subr.mxu0 0.0
        %1538 = vmatpush1.msra.mxu0 0.0
        %1539 = vmatprep.subr.mxu0 0.0
        %1540 = vmatpush1.msra.mxu0 0.0
        %1541 = vmatprep.subr.mxu0 0.0
        %1542 = vmatpush1.msra.mxu0 0.0
        %1543 = vmatprep.subr.mxu0 0.0
        %1544 = vmatpush1.msra.mxu0 0.0
        %1545 = vmatprep.subr.mxu0 0.0
        %1546 = vmatpush1.msra.mxu0 0.0
        %1547 = vmatprep.subr.mxu0 0.0
        %1548 = vmatpush1.msra.mxu0 0.0
        %1549 = vmatprep.subr.mxu0 0.0
        %1550 = vmatpush1.msra.mxu0 0.0
        %1551 = vmatprep.subr.mxu0 0.0
        %1552 = vmatpush1.msra.mxu0 0.0
        %1553 = vmatprep.subr.mxu0 0.0
        %1554 = vmatpush1.msra.mxu0 0.0
        %1555 = vmatprep.subr.mxu0 0.0
        %1556 = vmatpush1.msra.mxu0 0.0
        %1557 = vmatprep.subr.mxu0 0.0
        %1558 = vmatpush1.msra.mxu0 0.0
        %1559 = vmatprep.subr.mxu0 0.0
        %1560 = vmatpush1.msra.mxu0 0.0
        %1561 = vmatprep.subr.mxu0 0.0
        %1562 = vmatpush1.msra.mxu0 0.0
        %1563 = vmatprep.subr.mxu0 0.0
        %1564 = vmatpush1.msra.mxu0 0.0
        %1565 = vmatprep.subr.mxu0 0.0
        %1566 = vmatpush1.msra.mxu0 0.0
        %1567 = vmatprep.subr.mxu0 0.0
        %1568 = vmatpush1.msra.mxu0 0.0
        %1569 = vmatprep.subr.mxu0 0.0
        %1570 = vmatpush1.msra.mxu0 0.0
        %1571 = vmatprep.subr.mxu0 0.0
        %1572 = vmatpush1.msra.mxu0 0.0
        %1573 = vmatprep.subr.mxu0 0.0
        %1574 = vmatpush1.msra.mxu0 0.0
        %1575 = vmatprep.subr.mxu0 0.0
        %1576 = vmatpush1.msra.mxu0 0.0
        %1577 = vmatprep.subr.mxu0 0.0
        %1578 = vmatpush1.msra.mxu0 0.0
        %1579 = vmatprep.subr.mxu0 0.0
        %1580 = vmatpush1.msra.mxu0 0.0
        %1581 = vmatprep.subr.mxu0 0.0
        %1582 = vmatpush1.msra.mxu0 0.0
        %1583 = vmatprep.subr.mxu0 0.0
        %1584 = vmatpush1.msra.mxu0 0.0
        %1585 = vmatprep.mubr.f32.mxu0 0.0
        %1586 = vmatmul.mubr.f32.gmra.mrb[0].mxu0 %v1239
        %v1587 = vpop.f32.mrb[0].mxu0
        %v1588 = vadd.f32 %v1236, %v1587
        %v1589 = vpop.f32.mrb[0].mxu0
        %1590 = vdwg.mxu0
        %1591 = vmatprep.subr.mxu0 0.0
        %1592 = vmatpush1.msra.mxu0 %v1220
        %1593 = vmatprep.subr.mxu0 0.0
        %1594 = vmatpush1.msra.mxu0 %v1222
        %1595 = vmatprep.subr.mxu0 0.0
        %1596 = vmatpush1.msra.mxu0 0.0
        %1597 = vmatprep.subr.mxu0 0.0
        %1598 = vmatpush1.msra.mxu0 0.0
        %1599 = vmatprep.subr.mxu0 0.0
        %1600 = vmatpush1.msra.mxu0 0.0
        %1601 = vmatprep.subr.mxu0 0.0
        %1602 = vmatpush1.msra.mxu0 0.0
        %1603 = vmatprep.subr.mxu0 0.0
        %1604 = vmatpush1.msra.mxu0 0.0
        %1605 = vmatprep.subr.mxu0 0.0
        %1606 = vmatpush1.msra.mxu0 0.0
        %1607 = vmatprep.subr.mxu0 0.0
        %1608 = vmatpush1.msra.mxu0 0.0
        %1609 = vmatprep.subr.mxu0 0.0
        %1610 = vmatpush1.msra.mxu0 0.0
        %1611 = vmatprep.subr.mxu0 0.0
        %1612 = vmatpush1.msra.mxu0 0.0
        %1613 = vmatprep.subr.mxu0 0.0
        %1614 = vmatpush1.msra.mxu0 0.0
        %1615 = vmatprep.subr.mxu0 0.0
        %1616 = vmatpush1.msra.mxu0 0.0
        %1617 = vmatprep.subr.mxu0 0.0
        %1618 = vmatpush1.msra.mxu0 0.0
        %1619 = vmatprep.subr.mxu0 0.0
        %1620 = vmatpush1.msra.mxu0 0.0
        %1621 = vmatprep.subr.mxu0 0.0
        %1622 = vmatpush1.msra.mxu0 0.0
        %1623 = vmatprep.subr.mxu0 0.0
        %1624 = vmatpush1.msra.mxu0 0.0
        %1625 = vmatprep.subr.mxu0 0.0
        %1626 = vmatpush1.msra.mxu0 0.0
        %1627 = vmatprep.subr.mxu0 0.0
        %1628 = vmatpush1.msra.mxu0 0.0
        %1629 = vmatprep.subr.mxu0 0.0
        %1630 = vmatpush1.msra.mxu0 0.0
        %1631 = vmatprep.subr.mxu0 0.0
        %1632 = vmatpush1.msra.mxu0 0.0
        %1633 = vmatprep.subr.mxu0 0.0
        %1634 = vmatpush1.msra.mxu0 0.0
        %1635 = vmatprep.subr.mxu0 0.0
        %1636 = vmatpush1.msra.mxu0 0.0
        %1637 = vmatprep.subr.mxu0 0.0
        %1638 = vmatpush1.msra.mxu0 0.0
        %1639 = vmatprep.subr.mxu0 0.0
        %1640 = vmatpush1.msra.mxu0 0.0
        %1641 = vmatprep.subr.mxu0 0.0
        %1642 = vmatpush1.msra.mxu0 0.0
        %1643 = vmatprep.subr.mxu0 0.0
        %1644 = vmatpush1.msra.mxu0 0.0
        %1645 = vmatprep.subr.mxu0 0.0
        %1646 = vmatpush1.msra.mxu0 0.0
        %1647 = vmatprep.subr.mxu0 0.0
        %1648 = vmatpush1.msra.mxu0 0.0
        %1649 = vmatprep.subr.mxu0 0.0
        %1650 = vmatpush1.msra.mxu0 0.0
        %1651 = vmatprep.subr.mxu0 0.0
        %1652 = vmatpush1.msra.mxu0 0.0
        %1653 = vmatprep.subr.mxu0 0.0
        %1654 = vmatpush1.msra.mxu0 0.0
        %1655 = vmatprep.mubr.f32.mxu0 0.0
        %1656 = vmatmul.mubr.f32.gmra.mrb[0].mxu0 %v1239
        %v1657 = vpop.f32.mrb[0].mxu0
        %v1658 = vadd.f32 %v1236, %v1657
        %v1659 = vpop.f32.mrb[0].mxu0
        %1660 = vdwg.mxu0
        %1661 = vmatprep.subr.mxu0 0.0
        %1662 = vmatpush1.msra.mxu0 %v1224
        %1663 = vmatprep.subr.mxu0 0.0
        %1664 = vmatpush1.msra.mxu0 %v1226
        %1665 = vmatprep.subr.mxu0 0.0
        %1666 = vmatpush1.msra.mxu0 0.0
        %1667 = vmatprep.subr.mxu0 0.0
        %1668 = vmatpush1.msra.mxu0 0.0
        %1669 = vmatprep.subr.mxu0 0.0
        %1670 = vmatpush1.msra.mxu0 0.0
        %1671 = vmatprep.subr.mxu0 0.0
        %1672 = vmatpush1.msra.mxu0 0.0
        %1673 = vmatprep.subr.mxu0 0.0
        %1674 = vmatpush1.msra.mxu0 0.0
        %1675 = vmatprep.subr.mxu0 0.0
        %1676 = vmatpush1.msra.mxu0 0.0
        %1677 = vmatprep.subr.mxu0 0.0
        %1678 = vmatpush1.msra.mxu0 0.0
        %1679 = vmatprep.subr.mxu0 0.0
        %1680 = vmatpush1.msra.mxu0 0.0
        %1681 = vmatprep.subr.mxu0 0.0
        %1682 = vmatpush1.msra.mxu0 0.0
        %1683 = vmatprep.subr.mxu0 0.0
        %1684 = vmatpush1.msra.mxu0 0.0
        %1685 = vmatprep.subr.mxu0 0.0
        %1686 = vmatpush1.msra.mxu0 0.0
        %1687 = vmatprep.subr.mxu0 0.0
        %1688 = vmatpush1.msra.mxu0 0.0
        %1689 = vmatprep.subr.mxu0 0.0
        %1690 = vmatpush1.msra.mxu0 0.0
        %1691 = vmatprep.subr.mxu0 0.0
        %1692 = vmatpush1.msra.mxu0 0.0
        %1693 = vmatprep.subr.mxu0 0.0
        %1694 = vmatpush1.msra.mxu0 0.0
        %1695 = vmatprep.subr.mxu0 0.0
        %1696 = vmatpush1.msra.mxu0 0.0
        %1697 = vmatprep.subr.mxu0 0.0
        %1698 = vmatpush1.msra.mxu0 0.0
        %1699 = vmatprep.subr.mxu0 0.0
        %1700 = vmatpush1.msra.mxu0 0.0
        %1701 = vmatprep.subr.mxu0 0.0
        %1702 = vmatpush1.msra.mxu0 0.0
        %1703 = vmatprep.subr.mxu0 0.0
        %1704 = vmatpush1.msra.mxu0 0.0
        %1705 = vmatprep.subr.mxu0 0.0
        %1706 = vmatpush1.msra.mxu0 0.0
        %1707 = vmatprep.subr.mxu0 0.0
        %1708 = vmatpush1.msra.mxu0 0.0
        %1709 = vmatprep.subr.mxu0 0.0
        %1710 = vmatpush1.msra.mxu0 0.0
        %1711 = vmatprep.subr.mxu0 0.0
        %1712 = vmatpush1.msra.mxu0 0.0
        %1713 = vmatprep.subr.mxu0 0.0
        %1714 = vmatpush1.msra.mxu0 0.0
        %1715 = vmatprep.subr.mxu0 0.0
        %1716 = vmatpush1.msra.mxu0 0.0
        %1717 = vmatprep.subr.mxu0 0.0
        %1718 = vmatpush1.msra.mxu0 0.0
        %1719 = vmatprep.subr.mxu0 0.0
        %1720 = vmatpush1.msra.mxu0 0.0
        %1721 = vmatprep.subr.mxu0 0.0
        %1722 = vmatpush1.msra.mxu0 0.0
        %1723 = vmatprep.subr.mxu0 0.0
        %1724 = vmatpush1.msra.mxu0 0.0
        %1725 = vmatprep.mubr.f32.mxu0 0.0
        %1726 = vmatmul.mubr.f32.gmra.mrb[0].mxu0 %v1239
        %v1727 = vpop.f32.mrb[0].mxu0
        %v1728 = vadd.f32 %v1236, %v1727
        %v1729 = vpop.f32.mrb[0].mxu0
        %1730 = vdwg.mxu0
        %1731 = vmatprep.subr.mxu0 0.0
        %1732 = vmatpush1.msra.mxu0 %v1228
        %1733 = vmatprep.subr.mxu0 0.0
        %1734 = vmatpush1.msra.mxu0 %v1230
        %1735 = vmatprep.subr.mxu0 0.0
        %1736 = vmatpush1.msra.mxu0 0.0
        %1737 = vmatprep.subr.mxu0 0.0
        %1738 = vmatpush1.msra.mxu0 0.0
        %1739 = vmatprep.subr.mxu0 0.0
        %1740 = vmatpush1.msra.mxu0 0.0
        %1741 = vmatprep.subr.mxu0 0.0
        %1742 = vmatpush1.msra.mxu0 0.0
        %1743 = vmatprep.subr.mxu0 0.0
        %1744 = vmatpush1.msra.mxu0 0.0
        %1745 = vmatprep.subr.mxu0 0.0
        %1746 = vmatpush1.msra.mxu0 0.0
        %1747 = vmatprep.subr.mxu0 0.0
        %1748 = vmatpush1.msra.mxu0 0.0
        %1749 = vmatprep.subr.mxu0 0.0
        %1750 = vmatpush1.msra.mxu0 0.0
        %1751 = vmatprep.subr.mxu0 0.0
        %1752 = vmatpush1.msra.mxu0 0.0
        %1753 = vmatprep.subr.mxu0 0.0
        %1754 = vmatpush1.msra.mxu0 0.0
        %1755 = vmatprep.subr.mxu0 0.0
        %1756 = vmatpush1.msra.mxu0 0.0
        %1757 = vmatprep.subr.mxu0 0.0
        %1758 = vmatpush1.msra.mxu0 0.0
        %1759 = vmatprep.subr.mxu0 0.0
        %1760 = vmatpush1.msra.mxu0 0.0
        %1761 = vmatprep.subr.mxu0 0.0
        %1762 = vmatpush1.msra.mxu0 0.0
        %1763 = vmatprep.subr.mxu0 0.0
        %1764 = vmatpush1.msra.mxu0 0.0
        %1765 = vmatprep.subr.mxu0 0.0
        %1766 = vmatpush1.msra.mxu0 0.0
        %1767 = vmatprep.subr.mxu0 0.0
        %1768 = vmatpush1.msra.mxu0 0.0
        %1769 = vmatprep.subr.mxu0 0.0
        %1770 = vmatpush1.msra.mxu0 0.0
        %1771 = vmatprep.subr.mxu0 0.0
        %1772 = vmatpush1.msra.mxu0 0.0
        %1773 = vmatprep.subr.mxu0 0.0
        %1774 = vmatpush1.msra.mxu0 0.0
        %1775 = vmatprep.subr.mxu0 0.0
        %1776 = vmatpush1.msra.mxu0 0.0
        %1777 = vmatprep.subr.mxu0 0.0
        %1778 = vmatpush1.msra.mxu0 0.0
        %1779 = vmatprep.subr.mxu0 0.0
        %1780 = vmatpush1.msra.mxu0 0.0
        %1781 = vmatprep.subr.mxu0 0.0
        %1782 = vmatpush1.msra.mxu0 0.0
        %1783 = vmatprep.subr.mxu0 0.0
        %1784 = vmatpush1.msra.mxu0 0.0
        %1785 = vmatprep.subr.mxu0 0.0
        %1786 = vmatpush1.msra.mxu0 0.0
        %1787 = vmatprep.subr.mxu0 0.0
        %1788 = vmatpush1.msra.mxu0 0.0
        %1789 = vmatprep.subr.mxu0 0.0
        %1790 = vmatpush1.msra.mxu0 0.0
        %1791 = vmatprep.subr.mxu0 0.0
        %1792 = vmatpush1.msra.mxu0 0.0
        %1793 = vmatprep.subr.mxu0 0.0
        %1794 = vmatpush1.msra.mxu0 0.0
        %1795 = vmatprep.mubr.f32.mxu0 0.0
        %1796 = vmatmul.mubr.f32.gmra.mrb[0].mxu0 %v1239
        %v1797 = vpop.f32.mrb[0].mxu0
        %v1798 = vadd.f32 %v1236, %v1797
        %v1799 = vpop.f32.mrb[0].mxu0
        %1800 = vdwg.mxu0
        %v1801 = vxor.u32 %v1308, 2147483648
        %v1802 = vxor.u32 %v1378, 2147483648
        %v1803 = vxor.u32 %v1448, 2147483648
        %v1804 = vxor.u32 %v1518, 2147483648
        %v1805 = vxor.u32 %v1588, 2147483648
        %v1806 = vxor.u32 %v1658, 2147483648
        %v1807 = vxor.u32 %v1728, 2147483648
        %v1808 = vxor.u32 %v1798, 2147483648
        %v1809 = vmul.f32 %v1801, 1.442695
        %v1810 = vpow.pop %v1809
        %v1811 = vmul.f32 %v1802, 1.442695
        %v1812 = vpow.pop %v1811
        %v1813 = vmul.f32 %v1803, 1.442695
        %v1814 = vpow.pop %v1813
        %v1815 = vmul.f32 %v1804, 1.442695
        %v1816 = vpow.pop %v1815
        %v1817 = vmul.f32 %v1805, 1.442695
        %v1818 = vpow.pop %v1817
        %v1819 = vmul.f32 %v1806, 1.442695
        %v1820 = vpow.pop %v1819
        %v1821 = vmul.f32 %v1807, 1.442695
        %v1822 = vpow.pop %v1821
        %v1823 = vmul.f32 %v1808, 1.442695
        %v1824 = vpow.pop %v1823
        %v1825 = vadd.f32 %v1810, 1.0
        %v1826 = vadd.f32 %v1812, 1.0
        %v1827 = vadd.f32 %v1814, 1.0
        %v1828 = vadd.f32 %v1816, 1.0
        %v1829 = vadd.f32 %v1818, 1.0
        %v1830 = vadd.f32 %v1820, 1.0
        %v1831 = vadd.f32 %v1822, 1.0
        %v1832 = vadd.f32 %v1824, 1.0
        %v1833 = vrcp.pop %v1825
        %v1834 = vmul.f32 1.0, %v1833
        %v1835 = vrcp.pop %v1826
        %v1836 = vmul.f32 1.0, %v1835
        %v1837 = vrcp.pop %v1827
        %v1838 = vmul.f32 1.0, %v1837
        %v1839 = vrcp.pop %v1828
        %v1840 = vmul.f32 1.0, %v1839
        %v1841 = vrcp.pop %v1829
        %v1842 = vmul.f32 1.0, %v1841
        %v1843 = vrcp.pop %v1830
        %v1844 = vmul.f32 1.0, %v1843
        %v1845 = vrcp.pop %v1831
        %v1846 = vmul.f32 1.0, %v1845
        %v1847 = vrcp.pop %v1832
        %v1848 = vmul.f32 1.0, %v1847
        %v1849 = vld [vmem:[%s8] sm:$0xff]
        %1851 = vset.pattern.permute.xlu0 0
        %1852 = vperm.xlu0 %1851, %v1849
        %v1853 = vpop.permute.xlu0 %1852
        %v1855 = vmul.f32 %v1834, %v1853
        %v1856 = vmul.f32 %v1836, %v1853
        %v1857 = vmul.f32 %v1838, %v1853
        %v1858 = vmul.f32 %v1840, %v1853
        %v1859 = vmul.f32 %v1842, %v1853
        %v1860 = vmul.f32 %v1844, %v1853
        %v1861 = vmul.f32 %v1846, %v1853
        %v1862 = vmul.f32 %v1848, %v1853
        %v1863 = vrot.slane %v1855, 4
        %v1864 = vadd.f32 %v1855, %v1863
        %v1865 = vrot.slane %v1864, 2
        %v1866 = vadd.f32 %v1864, %v1865
        %v1867 = vrot.slane %v1866, 1
        %v1868 = vadd.f32 %v1866, %v1867
        %v1869 = vrot.slane %v1856, 4
        %v1870 = vadd.f32 %v1856, %v1869
        %v1871 = vrot.slane %v1870, 2
        %v1872 = vadd.f32 %v1870, %v1871
        %v1873 = vrot.slane %v1872, 1
        %v1874 = vadd.f32 %v1872, %v1873
        %v1875 = vrot.slane %v1857, 4
        %v1876 = vadd.f32 %v1857, %v1875
        %v1877 = vrot.slane %v1876, 2
        %v1878 = vadd.f32 %v1876, %v1877
        %v1879 = vrot.slane %v1878, 1
        %v1880 = vadd.f32 %v1878, %v1879
        %v1881 = vrot.slane %v1858, 4
        %v1882 = vadd.f32 %v1858, %v1881
        %v1883 = vrot.slane %v1882, 2
        %v1884 = vadd.f32 %v1882, %v1883
        %v1885 = vrot.slane %v1884, 1
        %v1886 = vadd.f32 %v1884, %v1885
        %v1887 = vrot.slane %v1859, 4
        %v1888 = vadd.f32 %v1859, %v1887
        %v1889 = vrot.slane %v1888, 2
        %v1890 = vadd.f32 %v1888, %v1889
        %v1891 = vrot.slane %v1890, 1
        %v1892 = vadd.f32 %v1890, %v1891
        %v1893 = vrot.slane %v1860, 4
        %v1894 = vadd.f32 %v1860, %v1893
        %v1895 = vrot.slane %v1894, 2
        %v1896 = vadd.f32 %v1894, %v1895
        %v1897 = vrot.slane %v1896, 1
        %v1898 = vadd.f32 %v1896, %v1897
        %v1899 = vrot.slane %v1861, 4
        %v1900 = vadd.f32 %v1861, %v1899
        %v1901 = vrot.slane %v1900, 2
        %v1902 = vadd.f32 %v1900, %v1901
        %v1903 = vrot.slane %v1902, 1
        %v1904 = vadd.f32 %v1902, %v1903
        %v1905 = vrot.slane %v1862, 4
        %v1906 = vadd.f32 %v1862, %v1905
        %v1907 = vrot.slane %v1906, 2
        %v1908 = vadd.f32 %v1906, %v1907
        %v1909 = vrot.slane %v1908, 1
        %v1910 = vadd.f32 %v1908, %v1909
        %s1911 = sld [smem:[#allocation2]]
        %v1912 = vstv %s1911
        %v1913 = vadd.f32 %v1868, %v1912
        %v1914 = vadd.f32 %v1874, %v1912
        %v1915 = vadd.f32 %v1880, %v1912
        %v1916 = vadd.f32 %v1886, %v1912
        %v1917 = vadd.f32 %v1892, %v1912
        %v1918 = vadd.f32 %v1898, %v1912
        %v1919 = vadd.f32 %v1904, %v1912
        %v1920 = vadd.f32 %v1910, %v1912
        %vm1921 = vcmp.eq.f32.partialorder %v421, 1.0
        %vm1930 = vcmask 1041409
        %v1931 = vsel %vm1930, %v1914, %v1913
        %vm1932 = vcmask 1042434
        %v1933 = vsel %vm1932, %v1915, %v1931
        %vm1934 = vcmask 1043459
        %v1935 = vsel %vm1934, %v1916, %v1933
        %vm1936 = vcmask 1044484
        %v1937 = vsel %vm1936, %v1917, %v1935
        %vm1938 = vcmask 1045509
        %v1939 = vsel %vm1938, %v1918, %v1937
        %vm1940 = vcmask 1046534
        %v1941 = vsel %vm1940, %v1919, %v1939
        %vm1942 = vcmask 1047559
        %v1943 = vsel %vm1942, %v1920, %v1941
        %v1945 = vsel %vm1921, %v1943, -2.1474836e+09
        %v1946 = vrot.slane %v1945, 4
        %v1947 = vmax.f32 %v1945, %v1946
        %v1948 = vrot.slane %v1947, 2
        %v1949 = vmax.f32 %v1947, %v1948
        %v1950 = vrot.slane %v1949, 1
        %v1951 = vmax.f32 %v1949, %v1950
        %v1952 = vsub.f32 %v1945, %v1951
        %v1953 = vmul.f32 %v1952, 1.442695
        %v1954 = vpow.pop %v1953
        %v1955 = vrot.slane %v1954, 4
        %v1956 = vadd.f32 %v1954, %v1955
        %v1957 = vrot.slane %v1956, 2
        %v1958 = vadd.f32 %v1956, %v1957
        %v1959 = vrot.slane %v1958, 1
        %v1960 = vadd.f32 %v1958, %v1959
        %v1961 = vrcp.pop %v1960
        %v1962 = vmul.f32 %v1954, %v1961
        %v1963 = vmul.f32 %v1962, %v421
        %v1965 = vcombine.high %v1963, %v1963
        %v1967 = vunpack.c.l.s4 1966171168
        %v1968 = vunpack.c.0.s8 %v1967
        %v1969 = vlaneseq
        %v1970 = vshrl.u32 %v1969, 7
        %v1971 = vsub.s32 %v1968, %v1970
        %v1972 = vrot.slane %v1963, %v1971
        %v1974 = vunpack.c.l.s4 1966171168
        %v1975 = vunpack.c.0.s8 %v1974
        %v1976 = vlaneseq
        %v1977 = vshrl.u32 %v1976, 7
        %v1978 = vsub.s32 %v1975, %v1977
        %v1979 = vrot.slane %v1965, %v1978
        %v1980 = vcombine.high %v1972, %v1972
        %v1981 = vcombine.high %v1979, %v1979
        %v1983 = vunpack.c.l.s4 1966171168
        %v1984 = vunpack.c.0.s8 %v1983
        %v1985 = vlaneseq
        %v1986 = vshrl.u32 %v1985, 7
        %v1987 = vsub.s32 %v1984, %v1986
        %v1988 = vrot.slane %v1972, %v1987
        %v1990 = vunpack.c.l.s4 1966171168
        %v1991 = vunpack.c.0.s8 %v1990
        %v1992 = vlaneseq
        %v1993 = vshrl.u32 %v1992, 7
        %v1994 = vsub.s32 %v1991, %v1993
        %v1995 = vrot.slane %v1979, %v1994
        %v1997 = vunpack.c.l.s4 1966171168
        %v1998 = vunpack.c.0.s8 %v1997
        %v1999 = vlaneseq
        %v2000 = vshrl.u32 %v1999, 7
        %v2001 = vsub.s32 %v1998, %v2000
        %v2002 = vrot.slane %v1980, %v2001
        %v2004 = vunpack.c.l.s4 1966171168
        %v2005 = vunpack.c.0.s8 %v2004
        %v2006 = vlaneseq
        %v2007 = vshrl.u32 %v2006, 7
        %v2008 = vsub.s32 %v2005, %v2007
        %v2009 = vrot.slane %v1981, %v2008
        %v2010 = vcombine.high %v1988, %v1988
        %v2011 = vcombine.high %v1995, %v1995
        %v2012 = vcombine.high %v2002, %v2002
        %v2013 = vcombine.high %v2009, %v2009
        %v2014 = vlaneseq
        %v2015 = vshrl.u32 %v2014, 7
        %v2016 = vsub.s32 0, %v2015
        %v2017 = vrot.slane %v1988, %v2016
        %v2018 = vlaneseq
        %v2019 = vshrl.u32 %v2018, 7
        %v2020 = vsub.s32 0, %v2019
        %v2021 = vrot.slane %v2002, %v2020
        %v2022 = vlaneseq
        %v2023 = vshrl.u32 %v2022, 7
        %v2024 = vsub.s32 0, %v2023
        %v2025 = vrot.slane %v2010, %v2024
        %v2026 = vlaneseq
        %v2027 = vshrl.u32 %v2026, 7
        %v2028 = vsub.s32 0, %v2027
        %v2029 = vrot.slane %v2012, %v2028
        %v2030 = vlaneseq
        %v2031 = vshrl.u32 %v2030, 7
        %v2032 = vsub.s32 0, %v2031
        %v2033 = vrot.slane %v1995, %v2032
        %v2034 = vlaneseq
        %v2035 = vshrl.u32 %v2034, 7
        %v2036 = vsub.s32 0, %v2035
        %v2037 = vrot.slane %v2009, %v2036
        %v2038 = vlaneseq
        %v2039 = vshrl.u32 %v2038, 7
        %v2040 = vsub.s32 0, %v2039
        %v2041 = vrot.slane %v2011, %v2040
        %v2042 = vlaneseq
        %v2043 = vshrl.u32 %v2042, 7
        %v2044 = vsub.s32 0, %v2043
        %v2045 = vrot.slane %v2013, %v2044
        %v2054 = vmul.f32 %v2017, %v413
        %v2055 = vmul.f32 %v2021, %v414
        %v2056 = vmul.f32 %v2025, %v415
        %v2057 = vmul.f32 %v2029, %v416
        %v2058 = vmul.f32 %v2033, %v417
        %v2059 = vmul.f32 %v2037, %v418
        %v2060 = vmul.f32 %v2041, %v419
        %v2061 = vmul.f32 %v2045, %v420
        %v2062 = vadd.f32 %v2054, %v2055
        %v2063 = vadd.f32 %v2062, %v2056
        %v2064 = vadd.f32 %v2063, %v2057
        %v2065 = vadd.f32 %v2064, %v2058
        %v2066 = vadd.f32 %v2065, %v2059
        %v2067 = vadd.f32 %v2066, %v2060
        %v2068 = vadd.f32 %v2067, %v2061
        %2069 = vst [vmem:[%s403] sm:$0xff] %v2068
        %s2070 = sand.u32 %s261, 1
        %s2071 = scalar_lea.sflag [#allocation5], %s2070
        %s2072 = sand.u32 %s261, 1
        %s2073 = smul.addr %s2072, 8
        %s2074 = scalar_lea.vmem [#allocation6], %s2073
        // Predicated region
        $region65: #{tpu_custom_call.1} parent=59 // pred_check
          %p2075 = pneg %p271
        $region66: #{tpu_custom_call.1} parent=59 // pred_check_branch
          %2077 = sbr.rel (%p2075) target = $region68
        $region67: #{tpu_custom_call.1} parent=59 // pred_region
          %s2079 = ssub.s32 128, 128
          %2080 = vsyncadd %s2071, %s2079
          %s2081 = smul.addr %s28, 128
          %s2082 = scalar_lea.hbm %s10, %s2081
          %s2084 = sshll.u32 %s2074, 4
          %s2085 = int_to_ptr.vmem [resolvable:$true] %s2084
          %2087 = dma.vmem_to_hbm [thread:$0]  %s2085, 128, %s2082, %s2071
        $region68: #{tpu_custom_call.1} parent=59 // pred_fallthru
          _
      $region60: #{tpu_custom_call.1} parent=5 // pred_fallthru
        _
      %p2088 = scmp.le.s32.totalorder 2, %s23
      // Predicated region
      $region69: #{tpu_custom_call.1} parent=5 // pred_check
        %p2089 = pneg %p2088
      $region70: #{tpu_custom_call.1} parent=5 // pred_check_branch
        %2091 = sbr.rel (%p2089) target = $region72
      $region71: #{tpu_custom_call.1} parent=5 // pred_region
        %s2092 = ssub.s32 %s23, 2
        // Predicated region
        $region73: #{tpu_custom_call.1} parent=71 // pred_check
          %p2093 = pneg %p277
        $region74: #{tpu_custom_call.1} parent=71 // pred_check_branch
          %2095 = sbr.rel (%p2093) target = $region76
        $region75: #{tpu_custom_call.1} parent=71 // pred_region
          %s2096 = sand.u32 %s262, 1
          %s2097 = scalar_lea.sflag [#allocation5], %s2096
          %s2098 = sand.u32 %s262, 1
          %s2099 = smul.addr %s2098, 8
          %s2100 = scalar_lea.vmem [#allocation6], %s2099
          %2101 = dma.done %s2097, 128
        $region76: #{tpu_custom_call.1} parent=71 // pred_fallthru
          _
      $region72: #{tpu_custom_call.1} parent=5 // pred_fallthru
        _
    $region6: #{tpu_custom_call.1} parent=1 // loop_footer
      %s27 = sadd.s32 1, %s23
    $region7: #{tpu_custom_call.1} parent=1 // loop_footer_branch
      %22 = sbr.rel target = $region3
    $region8: #{tpu_custom_call.1} parent=1 // loop_exit
      _
    %2102 = vsyncpa [#allocation4], 1
    %s2103 = scalar_lea.sflag [#allocation4], 1
    %2104 = vsyncpa %s2103, 1
    %2105 = vsyncpa [#allocation5], 1
    %s2106 = scalar_lea.sflag [#allocation5], 1
    %2107 = vsyncpa %s2106, 1

</llo_original>
